<compile_context>
chip_gen: v5e
topology: v5e:2x2
jax: 0.10.0
libtpu: 0.0.40
codegen_flags: <defaults>
</compile_context>

<pallas_src>
import functools

import jax
import jax.numpy as jnp
import numpy as np
from jax.experimental import pallas as pl
from jax.experimental.pallas import tpu as pltpu

_EPS = 1e-5
_LANE = 128


# -----------------------------------------------------------------------------
# Kernels
# -----------------------------------------------------------------------------
def _conv_stats_kernel(p_ref, w_ref, conv_ref, stats_ref):
    # p_ref: (TM, K) bf16 im2col patches      w_ref: (K, Cout) bf16
    # conv_ref: (TM, Cout) f32                stats_ref: (1, 2, Cout) f32
    acc = jnp.dot(p_ref[...], w_ref[...], preferred_element_type=jnp.float32)
    conv_ref[...] = acc
    # Per-tile partial BN statistics (summed across tiles in the wrapper).
    # E[x^2]-E[x]^2 in f32 is fine at these magnitudes (clamped >= 0 later);
    # switch to a shifted / Welford merge for very large activations.
    s = jnp.sum(acc, axis=0, keepdims=True)
    ss = jnp.sum(acc * acc, axis=0, keepdims=True)
    stats_ref[...] = jnp.concatenate([s, ss], axis=0)[None]


def _conv_skip_stats_kernel(p_ref, x_ref, w_ref, w3_ref, b3_ref,
                            conv_ref, skip_ref, stats_ref):
    # conv2 matmul + fused 1x1-conv skip (shares the grid / x tile read).
    acc = jnp.dot(p_ref[...], w_ref[...], preferred_element_type=jnp.float32)
    conv_ref[...] = acc
    skip_ref[...] = (jnp.dot(x_ref[...], w3_ref[...],
                             preferred_element_type=jnp.float32) + b3_ref[...])
    s = jnp.sum(acc, axis=0, keepdims=True)
    ss = jnp.sum(acc * acc, axis=0, keepdims=True)
    stats_ref[...] = jnp.concatenate([s, ss], axis=0)[None]


def _bn_relu_kernel(y_ref, s_ref, t_ref, out_ref):
    # Lane-dense: y, out are (TR, LANE); scale/shift pre-tiled to (1, LANE).
    out_ref[...] = jnp.maximum(y_ref[...] * s_ref[...] + t_ref[...],
                               0.0).astype(out_ref.dtype)


def _bn_add_relu_kernel(y_ref, skip_ref, s_ref, t_ref, out_ref):
    out_ref[...] = jnp.maximum(
        y_ref[...] * s_ref[...] + t_ref[...] + skip_ref[...],
        0.0).astype(out_ref.dtype)


# -----------------------------------------------------------------------------
# pallas_call wrappers
# -----------------------------------------------------------------------------
def _parallel_params():
    return pltpu.CompilerParams(dimension_semantics=("parallel",))


def _conv_pass(patches, w, tm):
    M, K = patches.shape
    Cout = w.shape[-1]
    n = M // tm
    return pl.pallas_call(
        _conv_stats_kernel,
        grid=(n,),
        in_specs=[pl.BlockSpec((tm, K), lambda i: (i, 0)),
                  pl.BlockSpec((K, Cout), lambda i: (0, 0))],
        out_specs=(pl.BlockSpec((tm, Cout), lambda i: (i, 0)),
                   pl.BlockSpec((1, 2, Cout), lambda i: (i, 0, 0))),
        out_shape=(jax.ShapeDtypeStruct((M, Cout), jnp.float32),
                   jax.ShapeDtypeStruct((n, 2, Cout), jnp.float32)),
        compiler_params=_parallel_params(),
    )(patches, w)


def _conv_skip_pass(patches, x2d, w, w3, b3, tm):
    M, K = patches.shape
    Cin = x2d.shape[-1]
    Cout = w.shape[-1]
    n = M // tm
    return pl.pallas_call(
        _conv_skip_stats_kernel,
        grid=(n,),
        in_specs=[pl.BlockSpec((tm, K), lambda i: (i, 0)),
                  pl.BlockSpec((tm, Cin), lambda i: (i, 0)),
                  pl.BlockSpec((K, Cout), lambda i: (0, 0)),
                  pl.BlockSpec((Cin, Cout), lambda i: (0, 0)),
                  pl.BlockSpec((1, Cout), lambda i: (0, 0))],
        out_specs=(pl.BlockSpec((tm, Cout), lambda i: (i, 0)),
                   pl.BlockSpec((tm, Cout), lambda i: (i, 0)),
                   pl.BlockSpec((1, 2, Cout), lambda i: (i, 0, 0))),
        out_shape=(jax.ShapeDtypeStruct((M, Cout), jnp.float32),
                   jax.ShapeDtypeStruct((M, Cout), jnp.float32),
                   jax.ShapeDtypeStruct((n, 2, Cout), jnp.float32)),
        compiler_params=_parallel_params(),
    )(patches, x2d, w, w3, b3)


def _bn_relu_pass(y_pk, scale_l, shift_l, tr, out_dtype):
    R, L = y_pk.shape
    n = R // tr
    return pl.pallas_call(
        _bn_relu_kernel,
        grid=(n,),
        in_specs=[pl.BlockSpec((tr, L), lambda i: (i, 0)),
                  pl.BlockSpec((1, L), lambda i: (0, 0)),
                  pl.BlockSpec((1, L), lambda i: (0, 0))],
        out_specs=pl.BlockSpec((tr, L), lambda i: (i, 0)),
        out_shape=jax.ShapeDtypeStruct((R, L), out_dtype),
        compiler_params=_parallel_params(),
    )(y_pk, scale_l, shift_l)


def _bn_add_relu_pass(y_pk, skip_pk, scale_l, shift_l, tr, out_dtype):
    R, L = y_pk.shape
    n = R // tr
    return pl.pallas_call(
        _bn_add_relu_kernel,
        grid=(n,),
        in_specs=[pl.BlockSpec((tr, L), lambda i: (i, 0)),
                  pl.BlockSpec((tr, L), lambda i: (i, 0)),
                  pl.BlockSpec((1, L), lambda i: (0, 0)),
                  pl.BlockSpec((1, L), lambda i: (0, 0))],
        out_specs=pl.BlockSpec((tr, L), lambda i: (i, 0)),
        out_shape=jax.ShapeDtypeStruct((R, L), out_dtype),
        compiler_params=_parallel_params(),
    )(y_pk, skip_pk, scale_l, shift_l)


# -----------------------------------------------------------------------------
# Plain-JAX glue
# -----------------------------------------------------------------------------
def _pick_tile(n, candidates=(256, 512, 128, 64, 32, 16, 8)):
    for c in candidates:
        if n % c == 0:
            return c
    return n


def _im2col_3x3(x):
    """(B, H, W, C) -> (B*H*W, 9*C) patches; tap-major then channel (HWIO)."""
    B, H, W, C = x.shape
    xp = jnp.pad(x, ((0, 0), (1, 1), (1, 1), (0, 0)))
    taps = [xp[:, dy:dy + H, dx:dx + W, :] for dy in range(3) for dx in range(3)]
    return jnp.concatenate(taps, axis=-1).reshape(B * H * W, 9 * C)


def _bn_scale_shift(part_stats, gamma, beta, count, eps):
    """Fold training-mode BN into one per-channel scale & shift (f32)."""
    s = jnp.sum(part_stats, axis=0)                 # (2, C): [sum, sumsq]
    mean = s[0] / count
    var = jnp.maximum(s[1] / count - mean * mean, 0.0)
    scale = gamma * jax.lax.rsqrt(var + eps)
    shift = beta - mean * scale
    return scale, shift


def _lane_tile(v, lane):
    """Tile a per-channel (C,) vector across `lane` lanes -> (1, lane)."""
    return jnp.tile(v, lane // v.shape[0]).reshape(1, lane)


@functools.partial(jax.jit, static_argnames=("use_1x1conv",))
def residual_forward(x_nhwc, params, *, use_1x1conv=True):
    # TODO(synk): strides > 1 not implemented (module default strides=1 is used).
    B, H, W, Cin = x_nhwc.shape
    w1 = params["w1"]
    Cout = w1.shape[-1]
    M = B * H * W
    TM = _pick_tile(M)

    # Lane-dense packed layout for elementwise work:
    # (M, Cout) row-major  <->  (rows, 128) when possible (fallback: unpacked).
    lane = _LANE if (_LANE % Cout == 0 and (M * Cout) % _LANE == 0) else Cout
    rows = (M * Cout) // lane
    TR = _pick_tile(rows)

    # ---- conv1 (single im2col matmul, bf16 MXU operands) + BN partial stats
    # NOTE: conv biases b1/b2 are cancelled exactly by training-mode BN and
    # are therefore never loaded by the kernels.
    p1 = _im2col_3x3(x_nhwc).astype(jnp.bfloat16)            # (M, 9*Cin)
    w1m = w1.reshape(9 * Cin, Cout).astype(jnp.bfloat16)
    conv1, st1 = _conv_pass(p1, w1m, TM)

    s1, t1 = _bn_scale_shift(st1, params["gamma1"], params["beta1"], M, _EPS)
    # BN1 + ReLU on the lane-dense packed view; emit bf16 (next MXU operand).
    y1_pk = _bn_relu_pass(conv1.reshape(rows, lane),
                          _lane_tile(s1, lane), _lane_tile(t1, lane),
                          TR, jnp.bfloat16)
    y1 = y1_pk.reshape(B, H, W, Cout)

    # ---- conv2 (+ fused 1x1-conv skip) + BN partial stats -------------------
    # TODO(synk): at large H*W, replace the wrapper-side im2col (9x patch
    # materialization + pad) with in-kernel halo handling / writing y1 into a
    # pre-padded buffer to cut HBM traffic further.
    p2 = _im2col_3x3(y1)                                     # (M, 9*Cout) bf16
    w2m = params["w2"].reshape(9 * Cout, Cout).astype(jnp.bfloat16)

    if use_1x1conv:
        x2d = x_nhwc.reshape(M, Cin).astype(jnp.bfloat16)
        w3m = params["w3"].reshape(Cin, Cout).astype(jnp.bfloat16)
        b3v = params["b3"].reshape(1, Cout).astype(jnp.float32)
        conv2, skip, st2 = _conv_skip_pass(p2, x2d, w2m, w3m, b3v, TM)
        skip_pk = skip.reshape(rows, lane)
    else:
        if Cin != Cout:
            raise ValueError("identity skip requires Cin == Cout")
        conv2, st2 = _conv_pass(p2, w2m, TM)                 # no dummy w3/b3
        skip_pk = x_nhwc.astype(jnp.float32).reshape(rows, lane)

    s2, t2 = _bn_scale_shift(st2, params["gamma2"], params["beta2"], M, _EPS)
    out_pk = _bn_add_relu_pass(conv2.reshape(rows, lane), skip_pk,
                               _lane_tile(s2, lane), _lane_tile(t2, lane),
                               TR, jnp.float32)
    return out_pk.reshape(B, H, W, Cout)


# -----------------------------------------------------------------------------
# Params (PyTorch-style init) and plain-JAX reference
# -----------------------------------------------------------------------------
def init_params(key, cin, cout, use_1x1conv):
    ks = jax.random.split(key, 6)

    def uni(k, shape, fan_in):
        bound = 1.0 / np.sqrt(fan_in)
        return jax.random.uniform(k, shape, jnp.float32, -bound, bound)

    p = {
        "w1": uni(ks[0], (3, 3, cin, cout), 9 * cin),
        "b1": uni(ks[1], (cout,), 9 * cin),       # dead under training-mode BN
        "w2": uni(ks[2], (3, 3, cout, cout), 9 * cout),
        "b2": uni(ks[3], (cout,), 9 * cout),      # dead under training-mode BN
        "gamma1": jnp.ones((cout,), jnp.float32),
        "beta1": jnp.zeros((cout,), jnp.float32),
        "gamma2": jnp.ones((cout,), jnp.float32),
        "beta2": jnp.zeros((cout,), jnp.float32),
    }
    if use_1x1conv:
        p["w3"] = uni(ks[4], (1, 1, cin, cout), cin)
        p["b3"] = uni(ks[5], (cout,), cin)
    return p


def _bn_train(y, gamma, beta, eps):
    mean = jnp.mean(y, axis=(0, 1, 2), keepdims=True)
    var = jnp.mean((y - mean) ** 2, axis=(0, 1, 2), keepdims=True)
    return (y - mean) * jax.lax.rsqrt(var + eps) * gamma + beta


def residual_reference(x, params, use_1x1conv):
    dn = ("NHWC", "HWIO", "NHWC")
    y = jax.lax.conv_general_dilated(x, params["w1"], (1, 1), "SAME",
                                     dimension_numbers=dn) + params["b1"]
    y = jnp.maximum(_bn_train(y, params["gamma1"], params["beta1"], _EPS), 0.0)
    y = jax.lax.conv_general_dilated(y, params["w2"], (1, 1), "SAME",
                                     dimension_numbers=dn) + params["b2"]
    y = _bn_train(y, params["gamma2"], params["beta2"], _EPS)
    if use_1x1conv:
        skip = jax.lax.conv_general_dilated(x, params["w3"], (1, 1), "SAME",
                                            dimension_numbers=dn) + params["b3"]
    else:
        skip = x
    return jnp.maximum(y + skip, 0.0)


if __name__ == "__main__":
    key = jax.random.PRNGKey(0)
    kx, kp, kx2, kp2 = jax.random.split(key, 4)

    # Residual(4, 8, use_1x1conv=True, strides=1); PyTorch NCHW input.
    B, Cin, H, W = 2, 4, 16, 16
    Cout = 8
    x_nchw = jax.random.normal(kx, (B, Cin, H, W), jnp.float32)
    x_nhwc = jnp.transpose(x_nchw, (0, 2, 3, 1))
    params = init_params(kp, Cin, Cout, True)

    out = jax.block_until_ready(residual_forward(x_nhwc, params, use_1x1conv=True))
    ref = residual_reference(x_nhwc, params, True)
    np.testing.assert_allclose(np.asarray(out), np.asarray(ref),
                               atol=5e-2, rtol=5e-2)   # bf16 MXU operands

    # Residual(8, 8, use_1x1conv=False, strides=1) — identity-skip path.
    x2 = jnp.transpose(jax.random.normal(kx2, (2, 8, 8, 8), jnp.float32),
                       (0, 2, 3, 1))
    params2 = init_params(kp2, 8, 8, False)
    out2 = jax.block_until_ready(residual_forward(x2, params2, use_1x1conv=False))
    ref2 = residual_reference(x2, params2, False)
    np.testing.assert_allclose(np.asarray(out2), np.asarray(ref2),
                               atol=5e-2, rtol=5e-2)

    print("KERNEL_OK")
</pallas_src>

<mosaic_0001>
module attributes {stable_mosaic.version = 11 : i64} {
  func.func @_conv_stats_kernel(%arg0: i32, %arg1: memref<256x36xbf16, #tpu.memory_space<vmem>>, %arg2: memref<36x8xbf16, #tpu.memory_space<vmem>>, %arg3: memref<256x8xf32, #tpu.memory_space<vmem>>, %arg4: memref<1x2x8xf32, #tpu.memory_space<vmem>>) attributes {dimension_semantics = [#tpu.dimension_semantics<parallel>], iteration_bounds = array<i64: 2>, scalar_prefetch = 0 : i64, scratch_operands = 0 : i64, tpu.core_type = #tpu.core_type<tc>, window_params = [{transform_indices = @transform_0, window_bounds = array<i64: 256, 36>}, {pipeline_mode = #tpu.pipeline_mode<synchronous>, transform_indices = @transform_1, window_bounds = array<i64: 36, 8>}, {transform_indices = @transform_2, window_bounds = array<i64: 256, 8>}, {transform_indices = @transform_3, window_bounds = array<i64: 1, 2, 8>}]} {
    %c0 = arith.constant 0 : index
    %c0_0 = arith.constant 0 : index
    %0 = vector.load %arg1[%c0, %c0_0] : memref<256x36xbf16, #tpu.memory_space<vmem>>, vector<256x36xbf16>
    %c0_1 = arith.constant 0 : index
    %c0_2 = arith.constant 0 : index
    %1 = vector.load %arg2[%c0_1, %c0_2] : memref<36x8xbf16, #tpu.memory_space<vmem>>, vector<36x8xbf16>
    %cst = arith.constant dense<0.000000e+00> : vector<256x8xf32>
    %2 = tpu.matmul %0, %1, %cst {dimension_numbers = #tpu.dot_dimension_numbers<[1], [0], [0], [1], [0, 0, 1, 1], [], []>} : vector<256x36xbf16>, vector<36x8xbf16>, vector<256x8xf32> -> vector<256x8xf32>
    %c0_3 = arith.constant 0 : index
    %c0_4 = arith.constant 0 : index
    %3 = vector.load %arg3[%c0_3, %c0_4] : memref<256x8xf32, #tpu.memory_space<vmem>>, vector<256x8xf32>
    tpu.vector_store %arg3[%c0_3, %c0_4], %2 {strides = array<i32>} : memref<256x8xf32, #tpu.memory_space<vmem>>, vector<256x8xf32>,
    %cst_5 = arith.constant dense<0.000000e+00> : vector<8xf32>
    %4 = vector.multi_reduction <add>, %2, %cst_5 [0] : vector<256x8xf32> to vector<8xf32>
    %5 = vector.shape_cast %4 : vector<8xf32> to vector<1x8xf32>
    %6 = arith.mulf %2, %2 : vector<256x8xf32>
    %cst_6 = arith.constant dense<0.000000e+00> : vector<8xf32>
    %7 = vector.multi_reduction <add>, %6, %cst_6 [0] : vector<256x8xf32> to vector<8xf32>
    %8 = vector.shape_cast %7 : vector<8xf32> to vector<1x8xf32>
    %9 = tpu.concatenate %5, %8 in 0 : vector<1x8xf32>, vector<1x8xf32> -> vector<2x8xf32>
    %10 = vector.shape_cast %9 : vector<2x8xf32> to vector<1x2x8xf32>
    %c0_7 = arith.constant 0 : index
    %c0_8 = arith.constant 0 : index
    %c0_9 = arith.constant 0 : index
    %11 = vector.load %arg4[%c0_7, %c0_8, %c0_9] : memref<1x2x8xf32, #tpu.memory_space<vmem>>, vector<1x2x8xf32>
    tpu.vector_store %arg4[%c0_7, %c0_8, %c0_9], %10 {strides = array<i32>} : memref<1x2x8xf32, #tpu.memory_space<vmem>>, vector<1x2x8xf32>,
    return
  }
  func.func @transform_0(%arg0: i32) -> (i32, i32) {
    %c0_i32 = arith.constant 0 : i32
    %c0_i32_0 = arith.constant 0 : i32
    return %arg0, %c0_i32 : i32, i32
  }
  func.func @transform_1(%arg0: i32) -> (i32, i32) {
    %c0_i32 = arith.constant 0 : i32
    %c0_i32_0 = arith.constant 0 : i32
    %c0_i32_1 = arith.constant 0 : i32
    return %c0_i32, %c0_i32_0 : i32, i32
  }
  func.func @transform_2(%arg0: i32) -> (i32, i32) {
    %c0_i32 = arith.constant 0 : i32
    %c0_i32_0 = arith.constant 0 : i32
    return %arg0, %c0_i32 : i32, i32
  }
  func.func @transform_3(%arg0: i32) -> (i32, i32, i32) {
    %c0_i32 = arith.constant 0 : i32
    %c0_i32_0 = arith.constant 0 : i32
    %c0_i32_1 = arith.constant 0 : i32
    return %arg0, %c0_i32, %c0_i32_0 : i32, i32, i32
  }
}

module attributes {stable_mosaic.version = 11 : i64} {
  func.func @_bn_relu_kernel(%arg0: i32, %arg1: memref<32x128xf32, #tpu.memory_space<vmem>>, %arg2: memref<1x128xf32, #tpu.memory_space<vmem>>, %arg3: memref<1x128xf32, #tpu.memory_space<vmem>>, %arg4: memref<32x128xbf16, #tpu.memory_space<vmem>>) attributes {dimension_semantics = [#tpu.dimension_semantics<parallel>], iteration_bounds = array<i64: 1>, scalar_prefetch = 0 : i64, scratch_operands = 0 : i64, tpu.core_type = #tpu.core_type<tc>, window_params = [{transform_indices = @transform_0, window_bounds = array<i64: 32, 128>}, {pipeline_mode = #tpu.pipeline_mode<synchronous>, transform_indices = @transform_1, window_bounds = array<i64: 1, 128>}, {pipeline_mode = #tpu.pipeline_mode<synchronous>, transform_indices = @transform_2, window_bounds = array<i64: 1, 128>}, {transform_indices = @transform_3, window_bounds = array<i64: 32, 128>}]} {
    %c0 = arith.constant 0 : index
    %c0_0 = arith.constant 0 : index
    %0 = vector.load %arg1[%c0, %c0_0] : memref<32x128xf32, #tpu.memory_space<vmem>>, vector<32x128xf32>
    %c0_1 = arith.constant 0 : index
    %c0_2 = arith.constant 0 : index
    %1 = vector.load %arg2[%c0_1, %c0_2] : memref<1x128xf32, #tpu.memory_space<vmem>>, vector<1x128xf32>
    %2 = vector.broadcast %1 : vector<1x128xf32> to vector<32x128xf32>
    %3 = arith.mulf %0, %2 : vector<32x128xf32>
    %c0_3 = arith.constant 0 : index
    %c0_4 = arith.constant 0 : index
    %4 = vector.load %arg3[%c0_3, %c0_4] : memref<1x128xf32, #tpu.memory_space<vmem>>, vector<1x128xf32>
    %5 = vector.broadcast %4 : vector<1x128xf32> to vector<32x128xf32>
    %6 = arith.addf %3, %5 : vector<32x128xf32>
    %cst = arith.constant 0.000000e+00 : f32
    %7 = vector.broadcast %cst : f32 to vector<32x128xf32>
    %8 = arith.maximumf %6, %7 : vector<32x128xf32>
    %9 = arith.truncf %8 : vector<32x128xf32> to vector<32x128xbf16>
    %c0_5 = arith.constant 0 : index
    %c0_6 = arith.constant 0 : index
    %10 = vector.load %arg4[%c0_5, %c0_6] : memref<32x128xbf16, #tpu.memory_space<vmem>>, vector<32x128xbf16>
    tpu.vector_store %arg4[%c0_5, %c0_6], %9 {strides = array<i32>} : memref<32x128xbf16, #tpu.memory_space<vmem>>, vector<32x128xbf16>,
    return
  }
  func.func @transform_0(%arg0: i32) -> (i32, i32) {
    %c0_i32 = arith.constant 0 : i32
    %c0_i32_0 = arith.constant 0 : i32
    return %arg0, %c0_i32 : i32, i32
  }
  func.func @transform_1(%arg0: i32) -> (i32, i32) {
    %c0_i32 = arith.constant 0 : i32
    %c0_i32_0 = arith.constant 0 : i32
    %c0_i32_1 = arith.constant 0 : i32
    return %c0_i32, %c0_i32_0 : i32, i32
  }
  func.func @transform_2(%arg0: i32) -> (i32, i32) {
    %c0_i32 = arith.constant 0 : i32
    %c0_i32_0 = arith.constant 0 : i32
    %c0_i32_1 = arith.constant 0 : i32
    return %c0_i32, %c0_i32_0 : i32, i32
  }
  func.func @transform_3(%arg0: i32) -> (i32, i32) {
    %c0_i32 = arith.constant 0 : i32
    %c0_i32_0 = arith.constant 0 : i32
    return %arg0, %c0_i32 : i32, i32
  }
}

module attributes {stable_mosaic.version = 11 : i64} {
  func.func @_conv_skip_stats_kernel(%arg0: i32, %arg1: memref<256x72xbf16, #tpu.memory_space<vmem>>, %arg2: memref<256x4xbf16, #tpu.memory_space<vmem>>, %arg3: memref<72x8xbf16, #tpu.memory_space<vmem>>, %arg4: memref<4x8xbf16, #tpu.memory_space<vmem>>, %arg5: memref<1x8xf32, #tpu.memory_space<vmem>>, %arg6: memref<256x8xf32, #tpu.memory_space<vmem>>, %arg7: memref<256x8xf32, #tpu.memory_space<vmem>>, %arg8: memref<1x2x8xf32, #tpu.memory_space<vmem>>) attributes {dimension_semantics = [#tpu.dimension_semantics<parallel>], iteration_bounds = array<i64: 2>, scalar_prefetch = 0 : i64, scratch_operands = 0 : i64, tpu.core_type = #tpu.core_type<tc>, window_params = [{transform_indices = @transform_0, window_bounds = array<i64: 256, 72>}, {transform_indices = @transform_1, window_bounds = array<i64: 256, 4>}, {pipeline_mode = #tpu.pipeline_mode<synchronous>, transform_indices = @transform_2, window_bounds = array<i64: 72, 8>}, {pipeline_mode = #tpu.pipeline_mode<synchronous>, transform_indices = @transform_3, window_bounds = array<i64: 4, 8>}, {pipeline_mode = #tpu.pipeline_mode<synchronous>, transform_indices = @transform_4, window_bounds = array<i64: 1, 8>}, {transform_indices = @transform_5, window_bounds = array<i64: 256, 8>}, {transform_indices = @transform_6, window_bounds = array<i64: 256, 8>}, {transform_indices = @transform_7, window_bounds = array<i64: 1, 2, 8>}]} {
    %c0 = arith.constant 0 : index
    %c0_0 = arith.constant 0 : index
    %0 = vector.load %arg1[%c0, %c0_0] : memref<256x72xbf16, #tpu.memory_space<vmem>>, vector<256x72xbf16>
    %c0_1 = arith.constant 0 : index
    %c0_2 = arith.constant 0 : index
    %1 = vector.load %arg3[%c0_1, %c0_2] : memref<72x8xbf16, #tpu.memory_space<vmem>>, vector<72x8xbf16>
    %cst = arith.constant dense<0.000000e+00> : vector<256x8xf32>
    %2 = tpu.matmul %0, %1, %cst {dimension_numbers = #tpu.dot_dimension_numbers<[1], [0], [0], [1], [0, 0, 1, 1], [], []>} : vector<256x72xbf16>, vector<72x8xbf16>, vector<256x8xf32> -> vector<256x8xf32>
    %c0_3 = arith.constant 0 : index
    %c0_4 = arith.constant 0 : index
    %3 = vector.load %arg6[%c0_3, %c0_4] : memref<256x8xf32, #tpu.memory_space<vmem>>, vector<256x8xf32>
    tpu.vector_store %arg6[%c0_3, %c0_4], %2 {strides = array<i32>} : memref<256x8xf32, #tpu.memory_space<vmem>>, vector<256x8xf32>,
    %c0_5 = arith.constant 0 : index
    %c0_6 = arith.constant 0 : index
    %4 = vector.load %arg2[%c0_5, %c0_6] : memref<256x4xbf16, #tpu.memory_space<vmem>>, vector<256x4xbf16>
    %c0_7 = arith.constant 0 : index
    %c0_8 = arith.constant 0 : index
    %5 = vector.load %arg4[%c0_7, %c0_8] : memref<4x8xbf16, #tpu.memory_space<vmem>>, vector<4x8xbf16>
    %cst_9 = arith.constant dense<0.000000e+00> : vector<256x8xf32>
    %6 = tpu.matmul %4, %5, %cst_9 {dimension_numbers = #tpu.dot_dimension_numbers<[1], [0], [0], [1], [0, 0, 1, 1], [], []>} : vector<256x4xbf16>, vector<4x8xbf16>, vector<256x8xf32> -> vector<256x8xf32>
    %c0_10 = arith.constant 0 : index
    %c0_11 = arith.constant 0 : index
    %7 = vector.load %arg5[%c0_10, %c0_11] : memref<1x8xf32, #tpu.memory_space<vmem>>, vector<1x8xf32>
    %8 = vector.broadcast %7 : vector<1x8xf32> to vector<256x8xf32>
    %9 = arith.addf %6, %8 : vector<256x8xf32>
    %c0_12 = arith.constant 0 : index
    %c0_13 = arith.constant 0 : index
    %10 = vector.load %arg7[%c0_12, %c0_13] : memref<256x8xf32, #tpu.memory_space<vmem>>, vector<256x8xf32>
    tpu.vector_store %arg7[%c0_12, %c0_13], %9 {strides = array<i32>} : memref<256x8xf32, #tpu.memory_space<vmem>>, vector<256x8xf32>,
    %cst_14 = arith.constant dense<0.000000e+00> : vector<8xf32>
    %11 = vector.multi_reduction <add>, %2, %cst_14 [0] : vector<256x8xf32> to vector<8xf32>
    %12 = vector.shape_cast %11 : vector<8xf32> to vector<1x8xf32>
    %13 = arith.mulf %2, %2 : vector<256x8xf32>
    %cst_15 = arith.constant dense<0.000000e+00> : vector<8xf32>
    %14 = vector.multi_reduction <add>, %13, %cst_15 [0] : vector<256x8xf32> to vector<8xf32>
    %15 = vector.shape_cast %14 : vector<8xf32> to vector<1x8xf32>
    %16 = tpu.concatenate %12, %15 in 0 : vector<1x8xf32>, vector<1x8xf32> -> vector<2x8xf32>
    %17 = vector.shape_cast %16 : vector<2x8xf32> to vector<1x2x8xf32>
    %c0_16 = arith.constant 0 : index
    %c0_17 = arith.constant 0 : index
    %c0_18 = arith.constant 0 : index
    %18 = vector.load %arg8[%c0_16, %c0_17, %c0_18] : memref<1x2x8xf32, #tpu.memory_space<vmem>>, vector<1x2x8xf32>
    tpu.vector_store %arg8[%c0_16, %c0_17, %c0_18], %17 {strides = array<i32>} : memref<1x2x8xf32, #tpu.memory_space<vmem>>, vector<1x2x8xf32>,
    return
  }
  func.func @transform_0(%arg0: i32) -> (i32, i32) {
    %c0_i32 = arith.constant 0 : i32
    %c0_i32_0 = arith.constant 0 : i32
    return %arg0, %c0_i32 : i32, i32
  }
  func.func @transform_1(%arg0: i32) -> (i32, i32) {
    %c0_i32 = arith.constant 0 : i32
    %c0_i32_0 = arith.constant 0 : i32
    return %arg0, %c0_i32 : i32, i32
  }
  func.func @transform_2(%arg0: i32) -> (i32, i32) {
    %c0_i32 = arith.constant 0 : i32
    %c0_i32_0 = arith.constant 0 : i32
    %c0_i32_1 = arith.constant 0 : i32
    return %c0_i32, %c0_i32_0 : i32, i32
  }
  func.func @transform_3(%arg0: i32) -> (i32, i32) {
    %c0_i32 = arith.constant 0 : i32
    %c0_i32_0 = arith.constant 0 : i32
    %c0_i32_1 = arith.constant 0 : i32
    return %c0_i32, %c0_i32_0 : i32, i32
  }
  func.func @transform_4(%arg0: i32) -> (i32, i32) {
    %c0_i32 = arith.constant 0 : i32
    %c0_i32_0 = arith.constant 0 : i32
    %c0_i32_1 = arith.constant 0 : i32
    return %c0_i32, %c0_i32_0 : i32, i32
  }
  func.func @transform_5(%arg0: i32) -> (i32, i32) {
    %c0_i32 = arith.constant 0 : i32
    %c0_i32_0 = arith.constant 0 : i32
    return %arg0, %c0_i32 : i32, i32
  }
  func.func @transform_6(%arg0: i32) -> (i32, i32) {
    %c0_i32 = arith.constant 0 : i32
    %c0_i32_0 = arith.constant 0 : i32
    return %arg0, %c0_i32 : i32, i32
  }
  func.func @transform_7(%arg0: i32) -> (i32, i32, i32) {
    %c0_i32 = arith.constant 0 : i32
    %c0_i32_0 = arith.constant 0 : i32
    %c0_i32_1 = arith.constant 0 : i32
    return %arg0, %c0_i32, %c0_i32_0 : i32, i32, i32
  }
}

module attributes {stable_mosaic.version = 11 : i64} {
  func.func @_bn_add_relu_kernel(%arg0: i32, %arg1: memref<32x128xf32, #tpu.memory_space<vmem>>, %arg2: memref<32x128xf32, #tpu.memory_space<vmem>>, %arg3: memref<1x128xf32, #tpu.memory_space<vmem>>, %arg4: memref<1x128xf32, #tpu.memory_space<vmem>>, %arg5: memref<32x128xf32, #tpu.memory_space<vmem>>) attributes {dimension_semantics = [#tpu.dimension_semantics<parallel>], iteration_bounds = array<i64: 1>, scalar_prefetch = 0 : i64, scratch_operands = 0 : i64, tpu.core_type = #tpu.core_type<tc>, window_params = [{transform_indices = @transform_0, window_bounds = array<i64: 32, 128>}, {transform_indices = @transform_1, window_bounds = array<i64: 32, 128>}, {pipeline_mode = #tpu.pipeline_mode<synchronous>, transform_indices = @transform_2, window_bounds = array<i64: 1, 128>}, {pipeline_mode = #tpu.pipeline_mode<synchronous>, transform_indices = @transform_3, window_bounds = array<i64: 1, 128>}, {transform_indices = @transform_4, window_bounds = array<i64: 32, 128>}]} {
    %c0 = arith.constant 0 : index
    %c0_0 = arith.constant 0 : index
    %0 = vector.load %arg1[%c0, %c0_0] : memref<32x128xf32, #tpu.memory_space<vmem>>, vector<32x128xf32>
    %c0_1 = arith.constant 0 : index
    %c0_2 = arith.constant 0 : index
    %1 = vector.load %arg3[%c0_1, %c0_2] : memref<1x128xf32, #tpu.memory_space<vmem>>, vector<1x128xf32>
    %2 = vector.broadcast %1 : vector<1x128xf32> to vector<32x128xf32>
    %3 = arith.mulf %0, %2 : vector<32x128xf32>
    %c0_3 = arith.constant 0 : index
    %c0_4 = arith.constant 0 : index
    %4 = vector.load %arg4[%c0_3, %c0_4] : memref<1x128xf32, #tpu.memory_space<vmem>>, vector<1x128xf32>
    %5 = vector.broadcast %4 : vector<1x128xf32> to vector<32x128xf32>
    %6 = arith.addf %3, %5 : vector<32x128xf32>
    %c0_5 = arith.constant 0 : index
    %c0_6 = arith.constant 0 : index
    %7 = vector.load %arg2[%c0_5, %c0_6] : memref<32x128xf32, #tpu.memory_space<vmem>>, vector<32x128xf32>
    %8 = arith.addf %6, %7 : vector<32x128xf32>
    %cst = arith.constant 0.000000e+00 : f32
    %9 = vector.broadcast %cst : f32 to vector<32x128xf32>
    %10 = arith.maximumf %8, %9 : vector<32x128xf32>
    %c0_7 = arith.constant 0 : index
    %c0_8 = arith.constant 0 : index
    %11 = vector.load %arg5[%c0_7, %c0_8] : memref<32x128xf32, #tpu.memory_space<vmem>>, vector<32x128xf32>
    tpu.vector_store %arg5[%c0_7, %c0_8], %10 {strides = array<i32>} : memref<32x128xf32, #tpu.memory_space<vmem>>, vector<32x128xf32>,
    return
  }
  func.func @transform_0(%arg0: i32) -> (i32, i32) {
    %c0_i32 = arith.constant 0 : i32
    %c0_i32_0 = arith.constant 0 : i32
    return %arg0, %c0_i32 : i32, i32
  }
  func.func @transform_1(%arg0: i32) -> (i32, i32) {
    %c0_i32 = arith.constant 0 : i32
    %c0_i32_0 = arith.constant 0 : i32
    return %arg0, %c0_i32 : i32, i32
  }
  func.func @transform_2(%arg0: i32) -> (i32, i32) {
    %c0_i32 = arith.constant 0 : i32
    %c0_i32_0 = arith.constant 0 : i32
    %c0_i32_1 = arith.constant 0 : i32
    return %c0_i32, %c0_i32_0 : i32, i32
  }
  func.func @transform_3(%arg0: i32) -> (i32, i32) {
    %c0_i32 = arith.constant 0 : i32
    %c0_i32_0 = arith.constant 0 : i32
    %c0_i32_1 = arith.constant 0 : i32
    return %c0_i32, %c0_i32_0 : i32, i32
  }
  func.func @transform_4(%arg0: i32) -> (i32, i32) {
    %c0_i32 = arith.constant 0 : i32
    %c0_i32_0 = arith.constant 0 : i32
    return %arg0, %c0_i32 : i32, i32
  }
}

</mosaic_0001>

<llo_original>
// kernel: tile.23
$region0: #{tile.23}
  #allocation0 [shape = 's32[1]{0}', space=sflag, size = 0x4, scoped, tag = 'scoped memory for tile.23']
  %s0 = inlined_call_operand.vmem [shape: f32[8], index: 0, kind: input, shape index: {}]
  %s1 = inlined_call_operand.vmem [shape: f32[16,8], index: 1, kind: output, shape index: {}]
  // Predicated region
  $region2: #{tile.23} parent=0 // pred_check
    _
  $region3: #{tile.23} parent=0 // pred_check_branch
    %3 = sbr.rel (0) target = $region5
  $region4: #{tile.23} parent=0 // pred_region
    _
  $region5: #{tile.23} parent=0 // pred_fallthru
    _
  %v4 = vld [vmem:[%s0] ss:$0 sm:$0xff]
  %5 = vst [vmem:[%s1] sm:$0xff] %v4
  %s6 = scalar_lea.vmem %s1, 8
  %7 = vst [vmem:[%s6] sm:$0xff] %v4

// kernel: tile.24
$region0: #{tile.24}
  %s0 = inlined_call_operand.vmem [shape: f32[16,8], index: 0, kind: input, shape index: {}]
  %s1 = inlined_call_operand.vmem [shape: f32[1,128], index: 1, kind: output, shape index: {}]
  $region1: #{tile.24} parent=0
    #allocation0 [shape = 'u8[4096]{0}', space=vmem, size = 0x1000, scoped, tag = 'scoped mem for output reshape']
    %v2 = vld [vmem:[%s0] sm:$0x1]
    %vm3 = vcmask 64512
    %4 = vst.msk [vmem:[#allocation0] sm:$0x1] %vm3, %v2
    %s5 = scalar_lea.vmem %s0, 15
    %v6 = vld [vmem:[%s5] sm:$0x1]
    %7 = vrot.lane.b32.xlu0 %v6, 120
    %v8 = vpop.permute.xlu0 %7
    %vm9 = vcmask 1048512
    %10 = vst.msk [vmem:[#allocation0] sm:$0x1] %vm9, %v8
    %s11 = scalar_lea.vmem %s0, 14
    %v12 = vld [vmem:[%s11] sm:$0x1]
    %13 = vrot.lane.b32.xlu0 %v12, 112
    %v14 = vpop.permute.xlu0 %13
    %vm15 = vcmask 982912
    %16 = vst.msk [vmem:[#allocation0] sm:$0x1] %vm15, %v14
    %s17 = scalar_lea.vmem %s0, 13
    %v18 = vld [vmem:[%s17] sm:$0x1]
    %19 = vrot.lane.b32.xlu0 %v18, 104
    %v20 = vpop.permute.xlu0 %19
    %vm21 = vcmask 917312
    %22 = vst.msk [vmem:[#allocation0] sm:$0x1] %vm21, %v20
    %s23 = scalar_lea.vmem %s0, 12
    %v24 = vld [vmem:[%s23] sm:$0x1]
    %25 = vrot.lane.b32.xlu0 %v24, 96
    %v26 = vpop.permute.xlu0 %25
    %vm27 = vcmask 851712
    %28 = vst.msk [vmem:[#allocation0] sm:$0x1] %vm27, %v26
    %s29 = scalar_lea.vmem %s0, 11
    %v30 = vld [vmem:[%s29] sm:$0x1]
    %31 = vrot.lane.b32.xlu0 %v30, 88
    %v32 = vpop.permute.xlu0 %31
    %vm33 = vcmask 786112
    %34 = vst.msk [vmem:[#allocation0] sm:$0x1] %vm33, %v32
    %s35 = scalar_lea.vmem %s0, 10
    %v36 = vld [vmem:[%s35] sm:$0x1]
    %37 = vrot.lane.b32.xlu0 %v36, 80
    %v38 = vpop.permute.xlu0 %37
    %vm39 = vcmask 720512
    %40 = vst.msk [vmem:[#allocation0] sm:$0x1] %vm39, %v38
    %s41 = scalar_lea.vmem %s0, 9
    %v42 = vld [vmem:[%s41] sm:$0x1]
    %43 = vrot.lane.b32.xlu0 %v42, 72
    %v44 = vpop.permute.xlu0 %43
    %vm45 = vcmask 654912
    %46 = vst.msk [vmem:[#allocation0] sm:$0x1] %vm45, %v44
    %s47 = scalar_lea.vmem %s0, 8
    %v48 = vld [vmem:[%s47] sm:$0x1]
    %49 = vrot.lane.b32.xlu0 %v48, 64
    %v50 = vpop.permute.xlu0 %49
    %vm51 = vcmask 589312
    %52 = vst.msk [vmem:[#allocation0] sm:$0x1] %vm51, %v50
    %s53 = scalar_lea.vmem %s0, 7
    %v54 = vld [vmem:[%s53] sm:$0x1]
    %55 = vrot.lane.b32.xlu0 %v54, 56
    %v56 = vpop.permute.xlu0 %55
    %vm57 = vcmask 523712
    %58 = vst.msk [vmem:[#allocation0] sm:$0x1] %vm57, %v56
    %s59 = scalar_lea.vmem %s0, 6
    %v60 = vld [vmem:[%s59] sm:$0x1]
    %61 = vrot.lane.b32.xlu0 %v60, 48
    %v62 = vpop.permute.xlu0 %61
    %vm63 = vcmask 458112
    %64 = vst.msk [vmem:[#allocation0] sm:$0x1] %vm63, %v62
    %s65 = scalar_lea.vmem %s0, 5
    %v66 = vld [vmem:[%s65] sm:$0x1]
    %67 = vrot.lane.b32.xlu0 %v66, 40
    %v68 = vpop.permute.xlu0 %67
    %vm69 = vcmask 392512
    %70 = vst.msk [vmem:[#allocation0] sm:$0x1] %vm69, %v68
    %s71 = scalar_lea.vmem %s0, 4
    %v72 = vld [vmem:[%s71] sm:$0x1]
    %73 = vrot.lane.b32.xlu0 %v72, 32
    %v74 = vpop.permute.xlu0 %73
    %vm75 = vcmask 326912
    %76 = vst.msk [vmem:[#allocation0] sm:$0x1] %vm75, %v74
    %s77 = scalar_lea.vmem %s0, 3
    %v78 = vld [vmem:[%s77] sm:$0x1]
    %79 = vrot.lane.b32.xlu0 %v78, 24
    %v80 = vpop.permute.xlu0 %79
    %vm81 = vcmask 261312
    %82 = vst.msk [vmem:[#allocation0] sm:$0x1] %vm81, %v80
    %s83 = scalar_lea.vmem %s0, 2
    %v84 = vld [vmem:[%s83] sm:$0x1]
    %85 = vrot.lane.b32.xlu0 %v84, 16
    %v86 = vpop.permute.xlu0 %85
    %vm87 = vcmask 195712
    %88 = vst.msk [vmem:[#allocation0] sm:$0x1] %vm87, %v86
    %s89 = scalar_lea.vmem %s0, 1
    %v90 = vld [vmem:[%s89] sm:$0x1]
    %91 = vrot.lane.b32.xlu0 %v90, 8
    %v92 = vpop.permute.xlu0 %91
    %vm93 = vcmask 130112
    %94 = vst.msk [vmem:[#allocation0] sm:$0x1] %vm93, %v92
    %s96 = ssub.s32 2, 1
    %v97 = vld [vmem:[#allocation0] sm:%s96]
    %s99 = ssub.s32 2, 1
    %100 = vst [vmem:[%s1] sm:%s99] %v97

// kernel: residual_forward.5
$region0: #{residual_forward.5}
  #allocation0 [shape = 'u32[]', space=smem, size = 0x4, offset = 0x4, fixed_abs, tag = 'smem constant byte address 0x4 - core index']
  #allocation1 [shape = 'u32[72,128]{1,0:T(1,128)}', space=vmem, size = 0x9000, scoped, tag = 'internal scratch']
  %s0 = inlined_call_operand.vmem [shape: f32[32,128], index: 0, kind: input, shape index: {}]
  %s1 = inlined_call_operand.vmem [shape: f32[1,128], index: 1, kind: input, shape index: {}]
  %s2 = inlined_call_operand.vmem [shape: f32[1,128], index: 2, kind: input, shape index: {}]
  %s3 = inlined_call_operand.vmem [shape: bf16[32,128], index: 3, kind: output, shape index: {}]
  %s4 = sld [smem:[#allocation0]]
  $region22: #{residual_forward.5} parent=0
    _
  %s6 = ssub.s32 1, %s4
  %s7 = scalar_select 0, %s6, %s4
  // Predicated region
  $region2: #{residual_forward.5} parent=0 // pred_check
    _
  $region3: #{residual_forward.5} parent=0 // pred_check_branch
    %9 = sbr.rel (0) target = $region5
  $region4: #{residual_forward.5} parent=0 // pred_region
    _
  $region5: #{residual_forward.5} parent=0 // pred_fallthru
    _
  // Predicated region
  $region6: #{residual_forward.5} parent=0 // pred_check
    _
  $region7: #{residual_forward.5} parent=0 // pred_check_branch
    %11 = sbr.rel (0) target = $region9
  $region8: #{residual_forward.5} parent=0 // pred_region
    _
  $region9: #{residual_forward.5} parent=0 // pred_fallthru
    _
  // Predicated region
  $region10: #{residual_forward.5} parent=0 // pred_check
    _
  $region11: #{residual_forward.5} parent=0 // pred_check_branch
    %13 = sbr.rel (0) target = $region13
  $region12: #{residual_forward.5} parent=0 // pred_region
    _
  $region13: #{residual_forward.5} parent=0 // pred_fallthru
    _
  %v14 = vld [vmem:[%s0] sm:$0xff]
  %v15 = vld [vmem:[%s0 + $0x8] sm:$0xff]
  %v16 = vld [vmem:[%s0 + $0x10] sm:$0xff]
  %v17 = vld [vmem:[%s0 + $0x18] sm:$0xff]
  %v18 = vld [vmem:[%s1] sm:$0x1]
  %v20 = vperm.slane %v18, 0
  %v22 = vmul.f32 %v14, %v20
  %v23 = vmul.f32 %v15, %v20
  %v24 = vmul.f32 %v16, %v20
  %v25 = vmul.f32 %v17, %v20
  %v26 = vld [vmem:[%s2] sm:$0x1]
  %v28 = vperm.slane %v26, 0
  %v30 = vadd.f32 %v22, %v28
  %v31 = vadd.f32 %v23, %v28
  %v32 = vadd.f32 %v24, %v28
  %v33 = vadd.f32 %v25, %v28
  %v34 = vmax.f32 %v30, 0.0
  %v35 = vmax.f32 %v31, 0.0
  %v36 = vmax.f32 %v32, 0.0
  %v37 = vmax.f32 %v33, 0.0
  %v38 = vpack.c.bf16 %v34, %v34
  %v39 = vpack.c.bf16 %v35, %v35
  %v40 = vpack.c.bf16 %v36, %v36
  %v41 = vpack.c.bf16 %v37, %v37
  %42 = vst [vmem:[%s3] sm:$0xf] %v38
  %43 = vst [vmem:[%s3 + $0x4] sm:$0xf] %v39
  %44 = vst [vmem:[%s3 + $0x8] sm:$0xf] %v40
  %45 = vst [vmem:[%s3 + $0xc] sm:$0xf] %v41
  // Predicated region
  $region14: #{residual_forward.5} parent=0 // pred_check
    _
  $region15: #{residual_forward.5} parent=0 // pred_check_branch
    %47 = sbr.rel (0) target = $region17
  $region16: #{residual_forward.5} parent=0 // pred_region
    _
  $region17: #{residual_forward.5} parent=0 // pred_fallthru
    _
  // Predicated region
  $region18: #{residual_forward.5} parent=0 // pred_check
    _
  $region19: #{residual_forward.5} parent=0 // pred_check_branch
    %49 = sbr.rel (0) target = $region21
  $region20: #{residual_forward.5} parent=0 // pred_region
    _
  $region21: #{residual_forward.5} parent=0 // pred_fallthru
    _

// kernel: residual_forward.4
$region0: #{residual_forward.4}
  #allocation0 [shape = 'u32[]', space=smem, size = 0x4, offset = 0x4, fixed_abs, tag = 'smem constant byte address 0x4 - core index']
  #allocation1 [shape = 'u32[72,128]{1,0:T(1,128)}', space=vmem, size = 0x9000, scoped, tag = 'internal scratch']
  %s0 = inlined_call_operand.vmem [shape: bf16[512,36], index: 0, kind: input, shape index: {}]
  %s1 = inlined_call_operand.vmem [shape: bf16[36,8], index: 1, kind: input, shape index: {}]
  %s2 = inlined_call_operand.vmem [shape: f32[512,8], index: 2, kind: output, shape index: {0}]
  %s3 = inlined_call_operand.vmem [shape: f32[2,2,8], index: 3, kind: output, shape index: {1}]
  %4 = xla_tuple %s2, %s3
  %s5 = sld [smem:[#allocation0]]
  $region49: #{residual_forward.4} parent=0
    _
  %s7 = ssub.s32 1, %s5
  %s8 = scalar_select 0, %s7, %s5
  loop: start=0, step=1, limit=4
  $region2: #{residual_forward.4} parent=0 // loop_pre_header
    _
  $region3: #{residual_forward.4} parent=0 // loop_header
    %s10 = sphi 0, %s14
    %p11 = scmp.ge.s32.totalorder %s10, 4
    %s20 = sphi 0, %s22
    %s23 = sphi 0, %s20
    %s24 = sphi 0, %s23
    %s40 = sphi 0, %s24
    %s44 = sphi 0, %s44
    %s46 = sphi 0, %s44
    %s47 = sphi 0, %s46
    %s61 = sphi 0, %s47
    %s67 = sphi 0, %s69
    %s70 = sphi 0, %s67
    %s71 = sphi 0, %s70
    %s87 = sphi 0, %s71
    %s93 = sphi 0, %s95
    %s96 = sphi 0, %s93
    %s97 = sphi 0, %s96
    %s113 = sphi 0, %s97
  $region4: #{residual_forward.4} parent=0 // loop_header_branch
    %13 = sbr.rel (%p11) target = $region8
  $region5: #{residual_forward.4} parent=0 // loop_body
    %s15 = ssub.s32 %s10, 1
    %s16 = ssub.s32 %s10, 2
    %s17 = sadd.s32 %s10, 1
    %s18 = ssub.s32 %s10, %s17
    %p19 = scmp.eq.s32.totalorder %s18, 0
    %s21 = sadd.s32 %s20, 1
    %s22 = scalar_select %p19, %s20, %s21
    %p25 = pneg %p19
    %p26 = scmp.eq.s32.totalorder %s10, 1
    %p27 = por %p25, %p26
    %p28 = scmp.ne.s32.totalorder %s20, %s23
    %p29 = scmp.eq.s32.totalorder %s10, 0
    %p30 = por %p28, %p29
    %p31 = scmp.ne.s32.totalorder %s20, %s23
    %p32 = scmp.eq.s32.totalorder %s15, 1
    %p33 = por %p31, %p32
    %p34 = scmp.ne.s32.totalorder %s23, %s24
    %p35 = scmp.eq.s32.totalorder %s15, 0
    %p36 = por %p34, %p35
    %p37 = scmp.ne.s32.totalorder %s23, %s24
    %p38 = scmp.eq.s32.totalorder %s16, 1
    %p39 = por %p37, %p38
    %p41 = scmp.ne.s32.totalorder %s24, %s40
    %p42 = scmp.eq.s32.totalorder %s16, 0
    %p43 = por %p41, %p42
    %s45 = sadd.s32 %s44, 1
    %p48 = scmp.eq.s32.totalorder %s10, 1
    %p49 = scmp.ne.s32.totalorder %s44, %s46
    %p50 = scmp.eq.s32.totalorder %s10, 0
    %p51 = por %p49, %p50
    %p52 = scmp.ne.s32.totalorder %s44, %s46
    %p53 = scmp.eq.s32.totalorder %s15, 1
    %p54 = por %p52, %p53
    %p55 = scmp.ne.s32.totalorder %s46, %s47
    %p56 = scmp.eq.s32.totalorder %s15, 0
    %p57 = por %p55, %p56
    %p58 = scmp.ne.s32.totalorder %s46, %s47
    %p59 = scmp.eq.s32.totalorder %s16, 1
    %p60 = por %p58, %p59
    %p62 = scmp.ne.s32.totalorder %s47, %s61
    %p63 = scmp.eq.s32.totalorder %s16, 0
    %p64 = por %p62, %p63
    %s65 = ssub.s32 %s10, %s17
    %p66 = scmp.eq.s32.totalorder %s65, 0
    %s68 = sadd.s32 %s67, 1
    %s69 = scalar_select %p66, %s67, %s68
    %p72 = pneg %p66
    %p73 = scmp.eq.s32.totalorder %s10, 1
    %p74 = por %p72, %p73
    %p75 = scmp.ne.s32.totalorder %s67, %s70
    %p76 = scmp.eq.s32.totalorder %s10, 0
    %p77 = por %p75, %p76
    %p78 = scmp.ne.s32.totalorder %s67, %s70
    %p79 = scmp.eq.s32.totalorder %s15, 1
    %p80 = por %p78, %p79
    %p81 = scmp.ne.s32.totalorder %s70, %s71
    %p82 = scmp.eq.s32.totalorder %s15, 0
    %p83 = por %p81, %p82
    %p84 = scmp.ne.s32.totalorder %s70, %s71
    %p85 = scmp.eq.s32.totalorder %s16, 1
    %p86 = por %p84, %p85
    %p88 = scmp.ne.s32.totalorder %s71, %s87
    %p89 = scmp.eq.s32.totalorder %s16, 0
    %p90 = por %p88, %p89
    %s91 = ssub.s32 %s10, %s17
    %p92 = scmp.eq.s32.totalorder %s91, 0
    %s94 = sadd.s32 %s93, 1
    %s95 = scalar_select %p92, %s93, %s94
    %p98 = pneg %p92
    %p99 = scmp.eq.s32.totalorder %s10, 1
    %p100 = por %p98, %p99
    %p101 = scmp.ne.s32.totalorder %s93, %s96
    %p102 = scmp.eq.s32.totalorder %s10, 0
    %p103 = por %p101, %p102
    %p104 = scmp.ne.s32.totalorder %s93, %s96
    %p105 = scmp.eq.s32.totalorder %s15, 1
    %p106 = por %p104, %p105
    %p107 = scmp.ne.s32.totalorder %s96, %s97
    %p108 = scmp.eq.s32.totalorder %s15, 0
    %p109 = por %p107, %p108
    %p110 = scmp.ne.s32.totalorder %s96, %s97
    %p111 = scmp.eq.s32.totalorder %s16, 1
    %p112 = por %p110, %p111
    %p114 = scmp.ne.s32.totalorder %s97, %s113
    %p115 = scmp.eq.s32.totalorder %s16, 0
    %p116 = por %p114, %p115
    %p117 = scmp.le.s32.totalorder 1, %s10
    %p118 = scmp.lt.s32.totalorder %s10, 3
    %p119 = pnand %p117, %p118
    %p120 = pneg %p119
    // Predicated region
    $region9: #{residual_forward.4} parent=5 // pred_check
      _
    $region10: #{residual_forward.4} parent=5 // pred_check_branch
      %122 = sbr.rel (%p119) target = $region12
    $region11: #{residual_forward.4} parent=5 // pred_region
      %s123 = ssub.s32 %s10, 1
      // Predicated region
      $region13: #{residual_forward.4} parent=11 // pred_check
        %p124 = pneg %p57
      $region14: #{residual_forward.4} parent=11 // pred_check_branch
        %126 = sbr.rel (%p124) target = $region16
      $region15: #{residual_forward.4} parent=11 // pred_region
        _
      $region16: #{residual_forward.4} parent=11 // pred_fallthru
        _
    $region12: #{residual_forward.4} parent=5 // pred_fallthru
      _
    %p127 = scmp.lt.s32.totalorder %s10, 2
    // Predicated region
    $region17: #{residual_forward.4} parent=5 // pred_check
      %p128 = pneg %p127
    $region18: #{residual_forward.4} parent=5 // pred_check_branch
      %130 = sbr.rel (%p128) target = $region20
    $region19: #{residual_forward.4} parent=5 // pred_region
      // Predicated region
      $region21: #{residual_forward.4} parent=19 // pred_check
        %p131 = pneg %p30
      $region22: #{residual_forward.4} parent=19 // pred_check_branch
        %133 = sbr.rel (%p131) target = $region24
      $region23: #{residual_forward.4} parent=19 // pred_region
        %s134 = smul.u32 32, %s10
        %p135 = scmp.lt.s32.totalorder %s134, 63
        %s136 = scalar_select %p135, %s134, 63
        %s137 = smul.addr %s136, 4
        %s138 = scalar_lea.vmem %s0, %s137
        %s139 = smul.u32 32, %s10
      $region24: #{residual_forward.4} parent=19 // pred_fallthru
        _
    $region20: #{residual_forward.4} parent=5 // pred_fallthru
      _
    %p140 = scmp.le.s32.totalorder 1, %s10
    %p141 = scmp.lt.s32.totalorder %s10, 3
    %p142 = pnand %p140, %p141
    %p143 = pneg %p142
    // Predicated region
    $region25: #{residual_forward.4} parent=5 // pred_check
      _
    $region26: #{residual_forward.4} parent=5 // pred_check_branch
      %145 = sbr.rel (%p142) target = $region28
    $region27: #{residual_forward.4} parent=5 // pred_region
      %s146 = ssub.s32 %s10, 1
      %s147 = smul.u32 32, %s15
      %p148 = scmp.lt.s32.totalorder %s147, 63
      %s149 = scalar_select %p148, %s147, 63
      %s150 = smul.addr %s149, 4
      %s151 = scalar_lea.vmem %s0, %s150
      %p152 = pneg %p36
      %p153 = pneg %p33
      %p154 = pneg %p57
      %p155 = pneg %p54
      %p156 = pneg %p83
      %p157 = pneg %p80
      %s158 = smul.u32 32, %s15
      %p159 = scmp.lt.s32.totalorder %s158, 63
      %s160 = scalar_select %p159, %s158, 63
      %s161 = smul.addr %s160, 8
      %s162 = scalar_lea.vmem %s2, %s161
      %p163 = pneg %p109
      %p164 = pneg %p106
      %p165 = scmp.lt.s32.totalorder %s15, 1
      %s166 = scalar_select %p165, %s15, 1
      %s167 = smul.addr %s166, 2
      %s168 = scalar_lea.vmem %s3, %s167
      %s169 = smul.u32 32, %s15
      %p170 = scmp.lt.s32.totalorder %s169, 63
      %s171 = scalar_select %p170, %s169, 63
      %s172 = smul.addr %s171, 4
      %s173 = scalar_lea.vmem %s0, %s172
      %s174 = smul.u32 32, %s15
      %s175 = smul.u32 32, %s15
      %p176 = scmp.lt.s32.totalorder %s175, 63
      %s177 = scalar_select %p176, %s175, 63
      %s178 = smul.addr %s177, 8
      %s179 = scalar_lea.vmem %s2, %s178
      %s180 = smul.u32 32, %s15
      %p181 = scmp.lt.s32.totalorder %s15, 1
      %s182 = scalar_select %p181, %s15, 1
      %s183 = smul.addr %s182, 2
      %s184 = scalar_lea.vmem %s3, %s183
      %v186 = vld [vmem:[%s173] sm:$0xf]
      %v187 = vld [vmem:[%s173 + $0x4] sm:$0xf]
      %v188 = vld [vmem:[%s173 + $0x8] sm:$0xf]
      %v189 = vld [vmem:[%s173 + $0xc] sm:$0xf]
      %v190 = vld [vmem:[%s173 + $0x10] sm:$0xf]
      %v191 = vld [vmem:[%s173 + $0x14] sm:$0xf]
      %v192 = vld [vmem:[%s173 + $0x18] sm:$0xf]
      %v193 = vld [vmem:[%s173 + $0x1c] sm:$0xf]
      %v194 = vld [vmem:[%s173 + $0x20] sm:$0xf]
      %v195 = vld [vmem:[%s173 + $0x24] sm:$0xf]
      %v196 = vld [vmem:[%s173 + $0x28] sm:$0xf]
      %v197 = vld [vmem:[%s173 + $0x2c] sm:$0xf]
      %v198 = vld [vmem:[%s173 + $0x30] sm:$0xf]
      %v199 = vld [vmem:[%s173 + $0x34] sm:$0xf]
      %v200 = vld [vmem:[%s173 + $0x38] sm:$0xf]
      %v201 = vld [vmem:[%s173 + $0x3c] sm:$0xf]
      %v202 = vld [vmem:[%s173 + $0x40] sm:$0xf]
      %v203 = vld [vmem:[%s173 + $0x44] sm:$0xf]
      %v204 = vld [vmem:[%s173 + $0x48] sm:$0xf]
      %v205 = vld [vmem:[%s173 + $0x4c] sm:$0xf]
      %v206 = vld [vmem:[%s173 + $0x50] sm:$0xf]
      %v207 = vld [vmem:[%s173 + $0x54] sm:$0xf]
      %v208 = vld [vmem:[%s173 + $0x58] sm:$0xf]
      %v209 = vld [vmem:[%s173 + $0x5c] sm:$0xf]
      %v210 = vld [vmem:[%s173 + $0x60] sm:$0xf]
      %v211 = vld [vmem:[%s173 + $0x64] sm:$0xf]
      %v212 = vld [vmem:[%s173 + $0x68] sm:$0xf]
      %v213 = vld [vmem:[%s173 + $0x6c] sm:$0xf]
      %v214 = vld [vmem:[%s173 + $0x70] sm:$0xf]
      %v215 = vld [vmem:[%s173 + $0x74] sm:$0xf]
      %v216 = vld [vmem:[%s173 + $0x78] sm:$0xf]
      %v217 = vld [vmem:[%s173 + $0x7c] sm:$0xf]
      %v218 = vld [vmem:[%s1] sm:$0xf]
      %v219 = vld [vmem:[%s1 + $0x4] sm:$0xf]
      %v220 = vld [vmem:[%s1 + $0x8] sm:$0xf]
      %v221 = vld [vmem:[%s1 + $0xc] sm:$0xf]
      %v222 = vld [vmem:[%s1 + $0x10] sm:$0x3]
      %v255 = vunpack.c.l.b16 %v186
      %v256 = vunpack.c.l.b16 %v187
      %v257 = vunpack.c.l.b16 %v188
      %v258 = vunpack.c.l.b16 %v189
      %v259 = vunpack.c.l.b16 %v190
      %v260 = vunpack.c.l.b16 %v191
      %v261 = vunpack.c.l.b16 %v192
      %v262 = vunpack.c.l.b16 %v193
      %v263 = vunpack.c.l.b16 %v194
      %v264 = vunpack.c.l.b16 %v195
      %v265 = vunpack.c.l.b16 %v196
      %v266 = vunpack.c.l.b16 %v197
      %v267 = vunpack.c.l.b16 %v198
      %v268 = vunpack.c.l.b16 %v199
      %v269 = vunpack.c.l.b16 %v200
      %v270 = vunpack.c.l.b16 %v201
      %v271 = vunpack.c.l.b16 %v202
      %v272 = vunpack.c.l.b16 %v203
      %v273 = vunpack.c.l.b16 %v204
      %v274 = vunpack.c.l.b16 %v205
      %v275 = vunpack.c.l.b16 %v206
      %v276 = vunpack.c.l.b16 %v207
      %v277 = vunpack.c.l.b16 %v208
      %v278 = vunpack.c.l.b16 %v209
      %v279 = vunpack.c.l.b16 %v210
      %v280 = vunpack.c.l.b16 %v211
      %v281 = vunpack.c.l.b16 %v212
      %v282 = vunpack.c.l.b16 %v213
      %v283 = vunpack.c.l.b16 %v214
      %v284 = vunpack.c.l.b16 %v215
      %v285 = vunpack.c.l.b16 %v216
      %v286 = vunpack.c.l.b16 %v217
      %v287 = vpack.c.b16 %v256, %v255
      %v288 = vpack.c.b16 %v258, %v257
      %v289 = vpack.c.b16 %v260, %v259
      %v290 = vpack.c.b16 %v262, %v261
      %v291 = vpack.c.b16 %v264, %v263
      %v292 = vpack.c.b16 %v266, %v265
      %v293 = vpack.c.b16 %v268, %v267
      %v294 = vpack.c.b16 %v270, %v269
      %v295 = vpack.c.b16 %v272, %v271
      %v296 = vpack.c.b16 %v274, %v273
      %v297 = vpack.c.b16 %v276, %v275
      %v298 = vpack.c.b16 %v278, %v277
      %v299 = vpack.c.b16 %v280, %v279
      %v300 = vpack.c.b16 %v282, %v281
      %v301 = vpack.c.b16 %v284, %v283
      %v302 = vpack.c.b16 %v286, %v285
      %v308 = vunpack.c.l.b16 %v218
      %v309 = vunpack.c.l.b16 %v219
      %v310 = vunpack.c.l.b16 %v220
      %v311 = vunpack.c.l.b16 %v221
      %v312 = vunpack.c.l.b16 %v222
      %v313 = vpack.c.b16 %v309, %v308
      %v314 = vpack.c.b16 %v311, %v310
      %v315 = vpack.c.b16 %v312, %v312
      %vm318 = vcmask 293888
      %v320 = vsel %vm318, %v287, 0
      %v323 = vsel %vm318, %v288, 0
      %v326 = vsel %vm318, %v289, 0
      %v329 = vsel %vm318, %v290, 0
      %v332 = vsel %vm318, %v291, 0
      %v335 = vsel %vm318, %v292, 0
      %v338 = vsel %vm318, %v293, 0
      %v341 = vsel %vm318, %v294, 0
      %v344 = vsel %vm318, %v295, 0
      %v347 = vsel %vm318, %v296, 0
      %v350 = vsel %vm318, %v297, 0
      %v353 = vsel %vm318, %v298, 0
      %v356 = vsel %vm318, %v299, 0
      %v359 = vsel %vm318, %v300, 0
      %v362 = vsel %vm318, %v301, 0
      %v365 = vsel %vm318, %v302, 0
      %vm367 = vcmask 1041408
      %v369 = vsel %vm367, %v315, 0
      %371 = vmatpush.bf16.msra.mxu0 0
      %372 = vmatpush.bf16.msra.mxu0 0
      %373 = vmatpush.bf16.msra.mxu0 0
      %374 = vmatpush.bf16.msra.mxu0 0
      %375 = vmatpush.bf16.msra.mxu0 0
      %376 = vmatpush.bf16.msra.mxu0 %v369
      %377 = vmatpush.bf16.msra.mxu0 %v314
      %378 = vmatpush.bf16.msra.mxu0 %v313
      %379 = vmatmul.bf16.gmra.mxu0 %v320
      %v380 = vpop.f32.mrf.mxu0
      %v381 = vadd.f32 0.0, %v380
      %v382 = vpop.f32.mrf.mxu0
      %v383 = vadd.f32 0.0, %v382
      %384 = vmatmul.bf16.gmra.mxu0 %v323
      %v385 = vpop.f32.mrf.mxu0
      %v386 = vadd.f32 0.0, %v385
      %v387 = vpop.f32.mrf.mxu0
      %v388 = vadd.f32 0.0, %v387
      %389 = vmatmul.bf16.gmra.mxu0 %v326
      %v390 = vpop.f32.mrf.mxu0
      %v391 = vadd.f32 0.0, %v390
      %v392 = vpop.f32.mrf.mxu0
      %v393 = vadd.f32 0.0, %v392
      %394 = vmatmul.bf16.gmra.mxu0 %v329
      %v395 = vpop.f32.mrf.mxu0
      %v396 = vadd.f32 0.0, %v395
      %v397 = vpop.f32.mrf.mxu0
      %v398 = vadd.f32 0.0, %v397
      %399 = vmatmul.bf16.gmra.mxu0 %v332
      %v400 = vpop.f32.mrf.mxu0
      %v401 = vadd.f32 0.0, %v400
      %v402 = vpop.f32.mrf.mxu0
      %v403 = vadd.f32 0.0, %v402
      %404 = vmatmul.bf16.gmra.mxu0 %v335
      %v405 = vpop.f32.mrf.mxu0
      %v406 = vadd.f32 0.0, %v405
      %v407 = vpop.f32.mrf.mxu0
      %v408 = vadd.f32 0.0, %v407
      %409 = vmatmul.bf16.gmra.mxu0 %v338
      %v410 = vpop.f32.mrf.mxu0
      %v411 = vadd.f32 0.0, %v410
      %v412 = vpop.f32.mrf.mxu0
      %v413 = vadd.f32 0.0, %v412
      %414 = vmatmul.bf16.gmra.mxu0 %v341
      %v415 = vpop.f32.mrf.mxu0
      %v416 = vadd.f32 0.0, %v415
      %v417 = vpop.f32.mrf.mxu0
      %v418 = vadd.f32 0.0, %v417
      %419 = vmatmul.bf16.gmra.mxu0 %v344
      %v420 = vpop.f32.mrf.mxu0
      %v421 = vadd.f32 0.0, %v420
      %v422 = vpop.f32.mrf.mxu0
      %v423 = vadd.f32 0.0, %v422
      %424 = vmatmul.bf16.gmra.mxu0 %v347
      %v425 = vpop.f32.mrf.mxu0
      %v426 = vadd.f32 0.0, %v425
      %v427 = vpop.f32.mrf.mxu0
      %v428 = vadd.f32 0.0, %v427
      %429 = vmatmul.bf16.gmra.mxu0 %v350
      %v430 = vpop.f32.mrf.mxu0
      %v431 = vadd.f32 0.0, %v430
      %v432 = vpop.f32.mrf.mxu0
      %v433 = vadd.f32 0.0, %v432
      %434 = vmatmul.bf16.gmra.mxu0 %v353
      %v435 = vpop.f32.mrf.mxu0
      %v436 = vadd.f32 0.0, %v435
      %v437 = vpop.f32.mrf.mxu0
      %v438 = vadd.f32 0.0, %v437
      %439 = vmatmul.bf16.gmra.mxu0 %v356
      %v440 = vpop.f32.mrf.mxu0
      %v441 = vadd.f32 0.0, %v440
      %v442 = vpop.f32.mrf.mxu0
      %v443 = vadd.f32 0.0, %v442
      %444 = vmatmul.bf16.gmra.mxu0 %v359
      %v445 = vpop.f32.mrf.mxu0
      %v446 = vadd.f32 0.0, %v445
      %v447 = vpop.f32.mrf.mxu0
      %v448 = vadd.f32 0.0, %v447
      %449 = vmatmul.bf16.gmra.mxu0 %v362
      %v450 = vpop.f32.mrf.mxu0
      %v451 = vadd.f32 0.0, %v450
      %v452 = vpop.f32.mrf.mxu0
      %v453 = vadd.f32 0.0, %v452
      %454 = vmatmul.bf16.gmra.mxu0 %v365
      %v455 = vpop.f32.mrf.mxu0
      %v456 = vadd.f32 0.0, %v455
      %v457 = vpop.f32.mrf.mxu0
      %v458 = vadd.f32 0.0, %v457
      %459 = vdwg.mxu0
      %vm460 = vcmask 64512
      %461 = vst.msk [vmem:[%s179] sm:$0xff] %vm460, %v381
      %462 = vst.msk [vmem:[%s179 + $0x8] sm:$0xff] %vm460, %v383
      %463 = vst.msk [vmem:[%s179 + $0x10] sm:$0xff] %vm460, %v386
      %464 = vst.msk [vmem:[%s179 + $0x18] sm:$0xff] %vm460, %v388
      %465 = vst.msk [vmem:[%s179 + $0x20] sm:$0xff] %vm460, %v391
      %466 = vst.msk [vmem:[%s179 + $0x28] sm:$0xff] %vm460, %v393
      %467 = vst.msk [vmem:[%s179 + $0x30] sm:$0xff] %vm460, %v396
      %468 = vst.msk [vmem:[%s179 + $0x38] sm:$0xff] %vm460, %v398
      %469 = vst.msk [vmem:[%s179 + $0x40] sm:$0xff] %vm460, %v401
      %470 = vst.msk [vmem:[%s179 + $0x48] sm:$0xff] %vm460, %v403
      %471 = vst.msk [vmem:[%s179 + $0x50] sm:$0xff] %vm460, %v406
      %472 = vst.msk [vmem:[%s179 + $0x58] sm:$0xff] %vm460, %v408
      %473 = vst.msk [vmem:[%s179 + $0x60] sm:$0xff] %vm460, %v411
      %474 = vst.msk [vmem:[%s179 + $0x68] sm:$0xff] %vm460, %v413
      %475 = vst.msk [vmem:[%s179 + $0x70] sm:$0xff] %vm460, %v416
      %476 = vst.msk [vmem:[%s179 + $0x78] sm:$0xff] %vm460, %v418
      %477 = vst.msk [vmem:[%s179 + $0x80] sm:$0xff] %vm460, %v421
      %478 = vst.msk [vmem:[%s179 + $0x88] sm:$0xff] %vm460, %v423
      %479 = vst.msk [vmem:[%s179 + $0x90] sm:$0xff] %vm460, %v426
      %480 = vst.msk [vmem:[%s179 + $0x98] sm:$0xff] %vm460, %v428
      %481 = vst.msk [vmem:[%s179 + $0xa0] sm:$0xff] %vm460, %v431
      %482 = vst.msk [vmem:[%s179 + $0xa8] sm:$0xff] %vm460, %v433
      %483 = vst.msk [vmem:[%s179 + $0xb0] sm:$0xff] %vm460, %v436
      %484 = vst.msk [vmem:[%s179 + $0xb8] sm:$0xff] %vm460, %v438
      %485 = vst.msk [vmem:[%s179 + $0xc0] sm:$0xff] %vm460, %v441
      %486 = vst.msk [vmem:[%s179 + $0xc8] sm:$0xff] %vm460, %v443
      %487 = vst.msk [vmem:[%s179 + $0xd0] sm:$0xff] %vm460, %v446
      %488 = vst.msk [vmem:[%s179 + $0xd8] sm:$0xff] %vm460, %v448
      %489 = vst.msk [vmem:[%s179 + $0xe0] sm:$0xff] %vm460, %v451
      %490 = vst.msk [vmem:[%s179 + $0xe8] sm:$0xff] %vm460, %v453
      %491 = vst.msk [vmem:[%s179 + $0xf0] sm:$0xff] %vm460, %v456
      %492 = vst.msk [vmem:[%s179 + $0xf8] sm:$0xff] %vm460, %v458
      %v493 = vsel %vm460, %v381, 0.0
      %v494 = vsel %vm460, %v383, 0.0
      %v495 = vadd.f32 %v493, %v494
      %v496 = vsel %vm460, %v386, 0.0
      %v497 = vadd.f32 %v495, %v496
      %v498 = vsel %vm460, %v388, 0.0
      %v499 = vadd.f32 %v497, %v498
      %v500 = vsel %vm460, %v391, 0.0
      %v501 = vadd.f32 %v499, %v500
      %v502 = vsel %vm460, %v393, 0.0
      %v503 = vadd.f32 %v501, %v502
      %v504 = vsel %vm460, %v396, 0.0
      %v505 = vadd.f32 %v503, %v504
      %v506 = vsel %vm460, %v398, 0.0
      %v507 = vadd.f32 %v505, %v506
      %v508 = vsel %vm460, %v401, 0.0
      %v509 = vadd.f32 %v507, %v508
      %v510 = vsel %vm460, %v403, 0.0
      %v511 = vadd.f32 %v509, %v510
      %v512 = vsel %vm460, %v406, 0.0
      %v513 = vadd.f32 %v511, %v512
      %v514 = vsel %vm460, %v408, 0.0
      %v515 = vadd.f32 %v513, %v514
      %v516 = vsel %vm460, %v411, 0.0
      %v517 = vadd.f32 %v515, %v516
      %v518 = vsel %vm460, %v413, 0.0
      %v519 = vadd.f32 %v517, %v518
      %v520 = vsel %vm460, %v416, 0.0
      %v521 = vadd.f32 %v519, %v520
      %v522 = vsel %vm460, %v418, 0.0
      %v523 = vadd.f32 %v521, %v522
      %v524 = vsel %vm460, %v421, 0.0
      %v525 = vadd.f32 %v523, %v524
      %v526 = vsel %vm460, %v423, 0.0
      %v527 = vadd.f32 %v525, %v526
      %v528 = vsel %vm460, %v426, 0.0
      %v529 = vadd.f32 %v527, %v528
      %v530 = vsel %vm460, %v428, 0.0
      %v531 = vadd.f32 %v529, %v530
      %v532 = vsel %vm460, %v431, 0.0
      %v533 = vadd.f32 %v531, %v532
      %v534 = vsel %vm460, %v433, 0.0
      %v535 = vadd.f32 %v533, %v534
      %v536 = vsel %vm460, %v436, 0.0
      %v537 = vadd.f32 %v535, %v536
      %v538 = vsel %vm460, %v438, 0.0
      %v539 = vadd.f32 %v537, %v538
      %v540 = vsel %vm460, %v441, 0.0
      %v541 = vadd.f32 %v539, %v540
      %v542 = vsel %vm460, %v443, 0.0
      %v543 = vadd.f32 %v541, %v542
      %v544 = vsel %vm460, %v446, 0.0
      %v545 = vadd.f32 %v543, %v544
      %v546 = vsel %vm460, %v448, 0.0
      %v547 = vadd.f32 %v545, %v546
      %v548 = vsel %vm460, %v451, 0.0
      %v549 = vadd.f32 %v547, %v548
      %v550 = vsel %vm460, %v453, 0.0
      %v551 = vadd.f32 %v549, %v550
      %v552 = vsel %vm460, %v456, 0.0
      %v553 = vadd.f32 %v551, %v552
      %v554 = vsel %vm460, %v458, 0.0
      %v555 = vadd.f32 %v553, %v554
      %v556 = vrot.slane %v555, 4
      %v557 = vadd.f32 %v555, %v556
      %v558 = vrot.slane %v557, 2
      %v559 = vadd.f32 %v557, %v558
      %v560 = vrot.slane %v559, 1
      %v561 = vadd.f32 %v559, %v560
      %v562 = vmul.f32 %v381, %v381
      %v563 = vmul.f32 %v383, %v383
      %v564 = vmul.f32 %v386, %v386
      %v565 = vmul.f32 %v388, %v388
      %v566 = vmul.f32 %v391, %v391
      %v567 = vmul.f32 %v393, %v393
      %v568 = vmul.f32 %v396, %v396
      %v569 = vmul.f32 %v398, %v398
      %v570 = vmul.f32 %v401, %v401
      %v571 = vmul.f32 %v403, %v403
      %v572 = vmul.f32 %v406, %v406
      %v573 = vmul.f32 %v408, %v408
      %v574 = vmul.f32 %v411, %v411
      %v575 = vmul.f32 %v413, %v413
      %v576 = vmul.f32 %v416, %v416
      %v577 = vmul.f32 %v418, %v418
      %v578 = vmul.f32 %v421, %v421
      %v579 = vmul.f32 %v423, %v423
      %v580 = vmul.f32 %v426, %v426
      %v581 = vmul.f32 %v428, %v428
      %v582 = vmul.f32 %v431, %v431
      %v583 = vmul.f32 %v433, %v433
      %v584 = vmul.f32 %v436, %v436
      %v585 = vmul.f32 %v438, %v438
      %v586 = vmul.f32 %v441, %v441
      %v587 = vmul.f32 %v443, %v443
      %v588 = vmul.f32 %v446, %v446
      %v589 = vmul.f32 %v448, %v448
      %v590 = vmul.f32 %v451, %v451
      %v591 = vmul.f32 %v453, %v453
      %v592 = vmul.f32 %v456, %v456
      %v593 = vmul.f32 %v458, %v458
      %v594 = vsel %vm460, %v562, 0.0
      %v595 = vsel %vm460, %v563, 0.0
      %v596 = vadd.f32 %v594, %v595
      %v597 = vsel %vm460, %v564, 0.0
      %v598 = vadd.f32 %v596, %v597
      %v599 = vsel %vm460, %v565, 0.0
      %v600 = vadd.f32 %v598, %v599
      %v601 = vsel %vm460, %v566, 0.0
      %v602 = vadd.f32 %v600, %v601
      %v603 = vsel %vm460, %v567, 0.0
      %v604 = vadd.f32 %v602, %v603
      %v605 = vsel %vm460, %v568, 0.0
      %v606 = vadd.f32 %v604, %v605
      %v607 = vsel %vm460, %v569, 0.0
      %v608 = vadd.f32 %v606, %v607
      %v609 = vsel %vm460, %v570, 0.0
      %v610 = vadd.f32 %v608, %v609
      %v611 = vsel %vm460, %v571, 0.0
      %v612 = vadd.f32 %v610, %v611
      %v613 = vsel %vm460, %v572, 0.0
      %v614 = vadd.f32 %v612, %v613
      %v615 = vsel %vm460, %v573, 0.0
      %v616 = vadd.f32 %v614, %v615
      %v617 = vsel %vm460, %v574, 0.0
      %v618 = vadd.f32 %v616, %v617
      %v619 = vsel %vm460, %v575, 0.0
      %v620 = vadd.f32 %v618, %v619
      %v621 = vsel %vm460, %v576, 0.0
      %v622 = vadd.f32 %v620, %v621
      %v623 = vsel %vm460, %v577, 0.0
      %v624 = vadd.f32 %v622, %v623
      %v625 = vsel %vm460, %v578, 0.0
      %v626 = vadd.f32 %v624, %v625
      %v627 = vsel %vm460, %v579, 0.0
      %v628 = vadd.f32 %v626, %v627
      %v629 = vsel %vm460, %v580, 0.0
      %v630 = vadd.f32 %v628, %v629
      %v631 = vsel %vm460, %v581, 0.0
      %v632 = vadd.f32 %v630, %v631
      %v633 = vsel %vm460, %v582, 0.0
      %v634 = vadd.f32 %v632, %v633
      %v635 = vsel %vm460, %v583, 0.0
      %v636 = vadd.f32 %v634, %v635
      %v637 = vsel %vm460, %v584, 0.0
      %v638 = vadd.f32 %v636, %v637
      %v639 = vsel %vm460, %v585, 0.0
      %v640 = vadd.f32 %v638, %v639
      %v641 = vsel %vm460, %v586, 0.0
      %v642 = vadd.f32 %v640, %v641
      %v643 = vsel %vm460, %v587, 0.0
      %v644 = vadd.f32 %v642, %v643
      %v645 = vsel %vm460, %v588, 0.0
      %v646 = vadd.f32 %v644, %v645
      %v647 = vsel %vm460, %v589, 0.0
      %v648 = vadd.f32 %v646, %v647
      %v649 = vsel %vm460, %v590, 0.0
      %v650 = vadd.f32 %v648, %v649
      %v651 = vsel %vm460, %v591, 0.0
      %v652 = vadd.f32 %v650, %v651
      %v653 = vsel %vm460, %v592, 0.0
      %v654 = vadd.f32 %v652, %v653
      %v655 = vsel %vm460, %v593, 0.0
      %v656 = vadd.f32 %v654, %v655
      %v657 = vrot.slane %v656, 4
      %v658 = vadd.f32 %v656, %v657
      %v659 = vrot.slane %v658, 2
      %v660 = vadd.f32 %v658, %v659
      %v661 = vrot.slane %v660, 1
      %v662 = vadd.f32 %v660, %v661
      %vm663 = vcmask 1040384
      %v664 = vsel %vm663, %v561, %v662
      %vm665 = vcmask 58368
      %666 = vst.msk [vmem:[%s184] sm:$0x3] %vm665, %v664
      %s667 = smul.u32 32, %s15
      %p668 = scmp.lt.s32.totalorder %s667, 63
      %s669 = scalar_select %p668, %s667, 63
      %s670 = smul.addr %s669, 8
      %s671 = scalar_lea.vmem %s2, %s670
      %p672 = scmp.lt.s32.totalorder %s15, 1
      %s673 = scalar_select %p672, %s15, 1
      %s674 = smul.addr %s673, 2
      %s675 = scalar_lea.vmem %s3, %s674
      // Predicated region
      $region29: #{residual_forward.4} parent=27 // pred_check
        %p676 = pneg %p80
      $region30: #{residual_forward.4} parent=27 // pred_check_branch
        %678 = sbr.rel (%p676) target = $region32
      $region31: #{residual_forward.4} parent=27 // pred_region
        %s679 = smul.u32 32, %s15
      $region32: #{residual_forward.4} parent=27 // pred_fallthru
        _
      // Predicated region
      $region33: #{residual_forward.4} parent=27 // pred_check
        %p680 = pneg %p106
      $region34: #{residual_forward.4} parent=27 // pred_check_branch
        %682 = sbr.rel (%p680) target = $region36
      $region35: #{residual_forward.4} parent=27 // pred_region
        _
      $region36: #{residual_forward.4} parent=27 // pred_fallthru
        _
    $region28: #{residual_forward.4} parent=5 // pred_fallthru
      _
    %p683 = scmp.le.s32.totalorder 2, %s10
    // Predicated region
    $region37: #{residual_forward.4} parent=5 // pred_check
      %p684 = pneg %p683
    $region38: #{residual_forward.4} parent=5 // pred_check_branch
      %686 = sbr.rel (%p684) target = $region40
    $region39: #{residual_forward.4} parent=5 // pred_region
      %s687 = ssub.s32 %s10, 2
      // Predicated region
      $region41: #{residual_forward.4} parent=39 // pred_check
        %p688 = pneg %p86
      $region42: #{residual_forward.4} parent=39 // pred_check_branch
        %690 = sbr.rel (%p688) target = $region44
      $region43: #{residual_forward.4} parent=39 // pred_region
        %s691 = smul.u32 32, %s16
        %p692 = scmp.lt.s32.totalorder %s691, 63
        %s693 = scalar_select %p692, %s691, 63
        %s694 = smul.addr %s693, 8
        %s695 = scalar_lea.vmem %s2, %s694
      $region44: #{residual_forward.4} parent=39 // pred_fallthru
        _
      // Predicated region
      $region45: #{residual_forward.4} parent=39 // pred_check
        %p696 = pneg %p112
      $region46: #{residual_forward.4} parent=39 // pred_check_branch
        %698 = sbr.rel (%p696) target = $region48
      $region47: #{residual_forward.4} parent=39 // pred_region
        %p699 = scmp.lt.s32.totalorder %s16, 1
        %s700 = scalar_select %p699, %s16, 1
        %s701 = smul.addr %s700, 2
        %s702 = scalar_lea.vmem %s3, %s701
      $region48: #{residual_forward.4} parent=39 // pred_fallthru
        _
    $region40: #{residual_forward.4} parent=5 // pred_fallthru
      _
  $region6: #{residual_forward.4} parent=0 // loop_footer
    %s14 = sadd.s32 1, %s10
  $region7: #{residual_forward.4} parent=0 // loop_footer_branch
    %9 = sbr.rel target = $region3
  $region8: #{residual_forward.4} parent=0 // loop_exit
    _

// kernel: residual_forward.7
$region0: #{residual_forward.7}
  #allocation0 [shape = 'u32[]', space=smem, size = 0x4, offset = 0x4, fixed_abs, tag = 'smem constant byte address 0x4 - core index']
  #allocation1 [shape = 'u32[72,128]{1,0:T(1,128)}', space=vmem, size = 0x9000, scoped, tag = 'internal scratch']
  %s0 = inlined_call_operand.vmem [shape: f32[32,128], index: 0, kind: input, shape index: {}]
  %s1 = inlined_call_operand.vmem [shape: f32[32,128], index: 1, kind: input, shape index: {}]
  %s2 = inlined_call_operand.vmem [shape: f32[1,128], index: 2, kind: input, shape index: {}]
  %s3 = inlined_call_operand.vmem [shape: f32[1,128], index: 3, kind: input, shape index: {}]
  %s4 = inlined_call_operand.vmem [shape: f32[32,128], index: 4, kind: output, shape index: {}]
  %s5 = sld [smem:[#allocation0]]
  $region26: #{residual_forward.7} parent=0
    _
  %s7 = ssub.s32 1, %s5
  %s8 = scalar_select 0, %s7, %s5
  // Predicated region
  $region2: #{residual_forward.7} parent=0 // pred_check
    _
  $region3: #{residual_forward.7} parent=0 // pred_check_branch
    %10 = sbr.rel (0) target = $region5
  $region4: #{residual_forward.7} parent=0 // pred_region
    _
  $region5: #{residual_forward.7} parent=0 // pred_fallthru
    _
  // Predicated region
  $region6: #{residual_forward.7} parent=0 // pred_check
    _
  $region7: #{residual_forward.7} parent=0 // pred_check_branch
    %12 = sbr.rel (0) target = $region9
  $region8: #{residual_forward.7} parent=0 // pred_region
    _
  $region9: #{residual_forward.7} parent=0 // pred_fallthru
    _
  // Predicated region
  $region10: #{residual_forward.7} parent=0 // pred_check
    _
  $region11: #{residual_forward.7} parent=0 // pred_check_branch
    %14 = sbr.rel (0) target = $region13
  $region12: #{residual_forward.7} parent=0 // pred_region
    _
  $region13: #{residual_forward.7} parent=0 // pred_fallthru
    _
  // Predicated region
  $region14: #{residual_forward.7} parent=0 // pred_check
    _
  $region15: #{residual_forward.7} parent=0 // pred_check_branch
    %16 = sbr.rel (0) target = $region17
  $region16: #{residual_forward.7} parent=0 // pred_region
    _
  $region17: #{residual_forward.7} parent=0 // pred_fallthru
    _
  %v17 = vld [vmem:[%s0] sm:$0xff]
  %v18 = vld [vmem:[%s0 + $0x8] sm:$0xff]
  %v19 = vld [vmem:[%s0 + $0x10] sm:$0xff]
  %v20 = vld [vmem:[%s0 + $0x18] sm:$0xff]
  %v21 = vld [vmem:[%s2] sm:$0x1]
  %v23 = vperm.slane %v21, 0
  %v25 = vmul.f32 %v17, %v23
  %v26 = vmul.f32 %v18, %v23
  %v27 = vmul.f32 %v19, %v23
  %v28 = vmul.f32 %v20, %v23
  %v29 = vld [vmem:[%s3] sm:$0x1]
  %v31 = vperm.slane %v29, 0
  %v33 = vadd.f32 %v25, %v31
  %v34 = vadd.f32 %v26, %v31
  %v35 = vadd.f32 %v27, %v31
  %v36 = vadd.f32 %v28, %v31
  %v37 = vld [vmem:[%s1] sm:$0xff]
  %v38 = vld [vmem:[%s1 + $0x8] sm:$0xff]
  %v39 = vld [vmem:[%s1 + $0x10] sm:$0xff]
  %v40 = vld [vmem:[%s1 + $0x18] sm:$0xff]
  %v41 = vadd.f32 %v33, %v37
  %v42 = vadd.f32 %v34, %v38
  %v43 = vadd.f32 %v35, %v39
  %v44 = vadd.f32 %v36, %v40
  %v45 = vmax.f32 %v41, 0.0
  %v46 = vmax.f32 %v42, 0.0
  %v47 = vmax.f32 %v43, 0.0
  %v48 = vmax.f32 %v44, 0.0
  %49 = vst [vmem:[%s4] sm:$0xff] %v45
  %50 = vst [vmem:[%s4 + $0x8] sm:$0xff] %v46
  %51 = vst [vmem:[%s4 + $0x10] sm:$0xff] %v47
  %52 = vst [vmem:[%s4 + $0x18] sm:$0xff] %v48
  // Predicated region
  $region18: #{residual_forward.7} parent=0 // pred_check
    _
  $region19: #{residual_forward.7} parent=0 // pred_check_branch
    %54 = sbr.rel (0) target = $region21
  $region20: #{residual_forward.7} parent=0 // pred_region
    _
  $region21: #{residual_forward.7} parent=0 // pred_fallthru
    _
  // Predicated region
  $region22: #{residual_forward.7} parent=0 // pred_check
    _
  $region23: #{residual_forward.7} parent=0 // pred_check_branch
    %56 = sbr.rel (0) target = $region25
  $region24: #{residual_forward.7} parent=0 // pred_region
    _
  $region25: #{residual_forward.7} parent=0 // pred_fallthru
    _

// kernel: residual_forward.6
$region0: #{residual_forward.6}
  #allocation0 [shape = 'u32[]', space=smem, size = 0x4, offset = 0x4, fixed_abs, tag = 'smem constant byte address 0x4 - core index']
  #allocation1 [shape = 'u32[72,128]{1,0:T(1,128)}', space=vmem, size = 0x9000, scoped, tag = 'internal scratch']
  %s0 = inlined_call_operand.vmem [shape: bf16[512,72], index: 0, kind: input, shape index: {}]
  %s1 = inlined_call_operand.vmem [shape: bf16[512,4], index: 1, kind: input, shape index: {}]
  %s2 = inlined_call_operand.vmem [shape: bf16[72,8], index: 2, kind: input, shape index: {}]
  %s3 = inlined_call_operand.vmem [shape: bf16[4,8], index: 3, kind: input, shape index: {}]
  %s4 = inlined_call_operand.vmem [shape: f32[1,8], index: 4, kind: input, shape index: {}]
  %s5 = inlined_call_operand.vmem [shape: f32[512,8], index: 5, kind: output, shape index: {0}]
  %s6 = inlined_call_operand.vmem [shape: f32[512,8], index: 6, kind: output, shape index: {1}]
  %s7 = inlined_call_operand.vmem [shape: f32[2,2,8], index: 7, kind: output, shape index: {2}]
  %8 = xla_tuple %s5, %s6, %s7
  %s9 = sld [smem:[#allocation0]]
  $region69: #{residual_forward.6} parent=0
    _
  %s11 = ssub.s32 1, %s9
  %s12 = scalar_select 0, %s11, %s9
  loop: start=0, step=1, limit=4
  $region2: #{residual_forward.6} parent=0 // loop_pre_header
    _
  $region3: #{residual_forward.6} parent=0 // loop_header
    %s14 = sphi 0, %s18
    %p15 = scmp.ge.s32.totalorder %s14, 4
    %s24 = sphi 0, %s26
    %s27 = sphi 0, %s24
    %s28 = sphi 0, %s27
    %s44 = sphi 0, %s28
    %s50 = sphi 0, %s52
    %s53 = sphi 0, %s50
    %s54 = sphi 0, %s53
    %s70 = sphi 0, %s54
    %s74 = sphi 0, %s74
    %s76 = sphi 0, %s74
    %s77 = sphi 0, %s76
    %s91 = sphi 0, %s77
    %s95 = sphi 0, %s95
    %s97 = sphi 0, %s95
    %s98 = sphi 0, %s97
    %s112 = sphi 0, %s98
    %s116 = sphi 0, %s116
    %s118 = sphi 0, %s116
    %s119 = sphi 0, %s118
    %s133 = sphi 0, %s119
    %s139 = sphi 0, %s141
    %s142 = sphi 0, %s139
    %s143 = sphi 0, %s142
    %s159 = sphi 0, %s143
    %s165 = sphi 0, %s167
    %s168 = sphi 0, %s165
    %s169 = sphi 0, %s168
    %s185 = sphi 0, %s169
    %s191 = sphi 0, %s193
    %s194 = sphi 0, %s191
    %s195 = sphi 0, %s194
    %s211 = sphi 0, %s195
  $region4: #{residual_forward.6} parent=0 // loop_header_branch
    %17 = sbr.rel (%p15) target = $region8
  $region5: #{residual_forward.6} parent=0 // loop_body
    %s19 = ssub.s32 %s14, 1
    %s20 = ssub.s32 %s14, 2
    %s21 = sadd.s32 %s14, 1
    %s22 = ssub.s32 %s14, %s21
    %p23 = scmp.eq.s32.totalorder %s22, 0
    %s25 = sadd.s32 %s24, 1
    %s26 = scalar_select %p23, %s24, %s25
    %p29 = pneg %p23
    %p30 = scmp.eq.s32.totalorder %s14, 1
    %p31 = por %p29, %p30
    %p32 = scmp.ne.s32.totalorder %s24, %s27
    %p33 = scmp.eq.s32.totalorder %s14, 0
    %p34 = por %p32, %p33
    %p35 = scmp.ne.s32.totalorder %s24, %s27
    %p36 = scmp.eq.s32.totalorder %s19, 1
    %p37 = por %p35, %p36
    %p38 = scmp.ne.s32.totalorder %s27, %s28
    %p39 = scmp.eq.s32.totalorder %s19, 0
    %p40 = por %p38, %p39
    %p41 = scmp.ne.s32.totalorder %s27, %s28
    %p42 = scmp.eq.s32.totalorder %s20, 1
    %p43 = por %p41, %p42
    %p45 = scmp.ne.s32.totalorder %s28, %s44
    %p46 = scmp.eq.s32.totalorder %s20, 0
    %p47 = por %p45, %p46
    %s48 = ssub.s32 %s14, %s21
    %p49 = scmp.eq.s32.totalorder %s48, 0
    %s51 = sadd.s32 %s50, 1
    %s52 = scalar_select %p49, %s50, %s51
    %p55 = pneg %p49
    %p56 = scmp.eq.s32.totalorder %s14, 1
    %p57 = por %p55, %p56
    %p58 = scmp.ne.s32.totalorder %s50, %s53
    %p59 = scmp.eq.s32.totalorder %s14, 0
    %p60 = por %p58, %p59
    %p61 = scmp.ne.s32.totalorder %s50, %s53
    %p62 = scmp.eq.s32.totalorder %s19, 1
    %p63 = por %p61, %p62
    %p64 = scmp.ne.s32.totalorder %s53, %s54
    %p65 = scmp.eq.s32.totalorder %s19, 0
    %p66 = por %p64, %p65
    %p67 = scmp.ne.s32.totalorder %s53, %s54
    %p68 = scmp.eq.s32.totalorder %s20, 1
    %p69 = por %p67, %p68
    %p71 = scmp.ne.s32.totalorder %s54, %s70
    %p72 = scmp.eq.s32.totalorder %s20, 0
    %p73 = por %p71, %p72
    %s75 = sadd.s32 %s74, 1
    %p78 = scmp.eq.s32.totalorder %s14, 1
    %p79 = scmp.ne.s32.totalorder %s74, %s76
    %p80 = scmp.eq.s32.totalorder %s14, 0
    %p81 = por %p79, %p80
    %p82 = scmp.ne.s32.totalorder %s74, %s76
    %p83 = scmp.eq.s32.totalorder %s19, 1
    %p84 = por %p82, %p83
    %p85 = scmp.ne.s32.totalorder %s76, %s77
    %p86 = scmp.eq.s32.totalorder %s19, 0
    %p87 = por %p85, %p86
    %p88 = scmp.ne.s32.totalorder %s76, %s77
    %p89 = scmp.eq.s32.totalorder %s20, 1
    %p90 = por %p88, %p89
    %p92 = scmp.ne.s32.totalorder %s77, %s91
    %p93 = scmp.eq.s32.totalorder %s20, 0
    %p94 = por %p92, %p93
    %s96 = sadd.s32 %s95, 1
    %p99 = scmp.eq.s32.totalorder %s14, 1
    %p100 = scmp.ne.s32.totalorder %s95, %s97
    %p101 = scmp.eq.s32.totalorder %s14, 0
    %p102 = por %p100, %p101
    %p103 = scmp.ne.s32.totalorder %s95, %s97
    %p104 = scmp.eq.s32.totalorder %s19, 1
    %p105 = por %p103, %p104
    %p106 = scmp.ne.s32.totalorder %s97, %s98
    %p107 = scmp.eq.s32.totalorder %s19, 0
    %p108 = por %p106, %p107
    %p109 = scmp.ne.s32.totalorder %s97, %s98
    %p110 = scmp.eq.s32.totalorder %s20, 1
    %p111 = por %p109, %p110
    %p113 = scmp.ne.s32.totalorder %s98, %s112
    %p114 = scmp.eq.s32.totalorder %s20, 0
    %p115 = por %p113, %p114
    %s117 = sadd.s32 %s116, 1
    %p120 = scmp.eq.s32.totalorder %s14, 1
    %p121 = scmp.ne.s32.totalorder %s116, %s118
    %p122 = scmp.eq.s32.totalorder %s14, 0
    %p123 = por %p121, %p122
    %p124 = scmp.ne.s32.totalorder %s116, %s118
    %p125 = scmp.eq.s32.totalorder %s19, 1
    %p126 = por %p124, %p125
    %p127 = scmp.ne.s32.totalorder %s118, %s119
    %p128 = scmp.eq.s32.totalorder %s19, 0
    %p129 = por %p127, %p128
    %p130 = scmp.ne.s32.totalorder %s118, %s119
    %p131 = scmp.eq.s32.totalorder %s20, 1
    %p132 = por %p130, %p131
    %p134 = scmp.ne.s32.totalorder %s119, %s133
    %p135 = scmp.eq.s32.totalorder %s20, 0
    %p136 = por %p134, %p135
    %s137 = ssub.s32 %s14, %s21
    %p138 = scmp.eq.s32.totalorder %s137, 0
    %s140 = sadd.s32 %s139, 1
    %s141 = scalar_select %p138, %s139, %s140
    %p144 = pneg %p138
    %p145 = scmp.eq.s32.totalorder %s14, 1
    %p146 = por %p144, %p145
    %p147 = scmp.ne.s32.totalorder %s139, %s142
    %p148 = scmp.eq.s32.totalorder %s14, 0
    %p149 = por %p147, %p148
    %p150 = scmp.ne.s32.totalorder %s139, %s142
    %p151 = scmp.eq.s32.totalorder %s19, 1
    %p152 = por %p150, %p151
    %p153 = scmp.ne.s32.totalorder %s142, %s143
    %p154 = scmp.eq.s32.totalorder %s19, 0
    %p155 = por %p153, %p154
    %p156 = scmp.ne.s32.totalorder %s142, %s143
    %p157 = scmp.eq.s32.totalorder %s20, 1
    %p158 = por %p156, %p157
    %p160 = scmp.ne.s32.totalorder %s143, %s159
    %p161 = scmp.eq.s32.totalorder %s20, 0
    %p162 = por %p160, %p161
    %s163 = ssub.s32 %s14, %s21
    %p164 = scmp.eq.s32.totalorder %s163, 0
    %s166 = sadd.s32 %s165, 1
    %s167 = scalar_select %p164, %s165, %s166
    %p170 = pneg %p164
    %p171 = scmp.eq.s32.totalorder %s14, 1
    %p172 = por %p170, %p171
    %p173 = scmp.ne.s32.totalorder %s165, %s168
    %p174 = scmp.eq.s32.totalorder %s14, 0
    %p175 = por %p173, %p174
    %p176 = scmp.ne.s32.totalorder %s165, %s168
    %p177 = scmp.eq.s32.totalorder %s19, 1
    %p178 = por %p176, %p177
    %p179 = scmp.ne.s32.totalorder %s168, %s169
    %p180 = scmp.eq.s32.totalorder %s19, 0
    %p181 = por %p179, %p180
    %p182 = scmp.ne.s32.totalorder %s168, %s169
    %p183 = scmp.eq.s32.totalorder %s20, 1
    %p184 = por %p182, %p183
    %p186 = scmp.ne.s32.totalorder %s169, %s185
    %p187 = scmp.eq.s32.totalorder %s20, 0
    %p188 = por %p186, %p187
    %s189 = ssub.s32 %s14, %s21
    %p190 = scmp.eq.s32.totalorder %s189, 0
    %s192 = sadd.s32 %s191, 1
    %s193 = scalar_select %p190, %s191, %s192
    %p196 = pneg %p190
    %p197 = scmp.eq.s32.totalorder %s14, 1
    %p198 = por %p196, %p197
    %p199 = scmp.ne.s32.totalorder %s191, %s194
    %p200 = scmp.eq.s32.totalorder %s14, 0
    %p201 = por %p199, %p200
    %p202 = scmp.ne.s32.totalorder %s191, %s194
    %p203 = scmp.eq.s32.totalorder %s19, 1
    %p204 = por %p202, %p203
    %p205 = scmp.ne.s32.totalorder %s194, %s195
    %p206 = scmp.eq.s32.totalorder %s19, 0
    %p207 = por %p205, %p206
    %p208 = scmp.ne.s32.totalorder %s194, %s195
    %p209 = scmp.eq.s32.totalorder %s20, 1
    %p210 = por %p208, %p209
    %p212 = scmp.ne.s32.totalorder %s195, %s211
    %p213 = scmp.eq.s32.totalorder %s20, 0
    %p214 = por %p212, %p213
    %p215 = scmp.le.s32.totalorder 1, %s14
    %p216 = scmp.lt.s32.totalorder %s14, 3
    %p217 = pnand %p215, %p216
    %p218 = pneg %p217
    // Predicated region
    $region9: #{residual_forward.6} parent=5 // pred_check
      _
    $region10: #{residual_forward.6} parent=5 // pred_check_branch
      %220 = sbr.rel (%p217) target = $region12
    $region11: #{residual_forward.6} parent=5 // pred_region
      %s221 = ssub.s32 %s14, 1
      // Predicated region
      $region13: #{residual_forward.6} parent=11 // pred_check
        %p222 = pneg %p87
      $region14: #{residual_forward.6} parent=11 // pred_check_branch
        %224 = sbr.rel (%p222) target = $region16
      $region15: #{residual_forward.6} parent=11 // pred_region
        _
      $region16: #{residual_forward.6} parent=11 // pred_fallthru
        _
      // Predicated region
      $region17: #{residual_forward.6} parent=11 // pred_check
        %p225 = pneg %p108
      $region18: #{residual_forward.6} parent=11 // pred_check_branch
        %227 = sbr.rel (%p225) target = $region20
      $region19: #{residual_forward.6} parent=11 // pred_region
        _
      $region20: #{residual_forward.6} parent=11 // pred_fallthru
        _
      // Predicated region
      $region21: #{residual_forward.6} parent=11 // pred_check
        %p228 = pneg %p129
      $region22: #{residual_forward.6} parent=11 // pred_check_branch
        %230 = sbr.rel (%p228) target = $region24
      $region23: #{residual_forward.6} parent=11 // pred_region
        _
      $region24: #{residual_forward.6} parent=11 // pred_fallthru
        _
    $region12: #{residual_forward.6} parent=5 // pred_fallthru
      _
    %p231 = scmp.lt.s32.totalorder %s14, 2
    // Predicated region
    $region25: #{residual_forward.6} parent=5 // pred_check
      %p232 = pneg %p231
    $region26: #{residual_forward.6} parent=5 // pred_check_branch
      %234 = sbr.rel (%p232) target = $region28
    $region27: #{residual_forward.6} parent=5 // pred_region
      // Predicated region
      $region29: #{residual_forward.6} parent=27 // pred_check
        %p235 = pneg %p34
      $region30: #{residual_forward.6} parent=27 // pred_check_branch
        %237 = sbr.rel (%p235) target = $region32
      $region31: #{residual_forward.6} parent=27 // pred_region
        %s238 = smul.u32 32, %s14
        %p239 = scmp.lt.s32.totalorder %s238, 63
        %s240 = scalar_select %p239, %s238, 63
        %s241 = smul.addr %s240, 4
        %s242 = scalar_lea.vmem %s0, %s241
        %s243 = smul.u32 32, %s14
      $region32: #{residual_forward.6} parent=27 // pred_fallthru
        _
      // Predicated region
      $region33: #{residual_forward.6} parent=27 // pred_check
        %p244 = pneg %p60
      $region34: #{residual_forward.6} parent=27 // pred_check_branch
        %246 = sbr.rel (%p244) target = $region36
      $region35: #{residual_forward.6} parent=27 // pred_region
        %s247 = smul.u32 32, %s14
        %p248 = scmp.lt.s32.totalorder %s247, 63
        %s249 = scalar_select %p248, %s247, 63
        %s250 = smul.addr %s249, 4
        %s251 = scalar_lea.vmem %s1, %s250
        %s252 = smul.u32 32, %s14
      $region36: #{residual_forward.6} parent=27 // pred_fallthru
        _
    $region28: #{residual_forward.6} parent=5 // pred_fallthru
      _
    %p253 = scmp.le.s32.totalorder 1, %s14
    %p254 = scmp.lt.s32.totalorder %s14, 3
    %p255 = pnand %p253, %p254
    %p256 = pneg %p255
    // Predicated region
    $region37: #{residual_forward.6} parent=5 // pred_check
      _
    $region38: #{residual_forward.6} parent=5 // pred_check_branch
      %258 = sbr.rel (%p255) target = $region40
    $region39: #{residual_forward.6} parent=5 // pred_region
      %s259 = ssub.s32 %s14, 1
      %s260 = smul.u32 32, %s19
      %p261 = scmp.lt.s32.totalorder %s260, 63
      %s262 = scalar_select %p261, %s260, 63
      %s263 = smul.addr %s262, 4
      %s264 = scalar_lea.vmem %s0, %s263
      %p265 = pneg %p40
      %p266 = pneg %p37
      %s267 = smul.u32 32, %s19
      %p268 = scmp.lt.s32.totalorder %s267, 63
      %s269 = scalar_select %p268, %s267, 63
      %s270 = smul.addr %s269, 4
      %s271 = scalar_lea.vmem %s1, %s270
      %p272 = pneg %p66
      %p273 = pneg %p63
      %p274 = pneg %p87
      %p275 = pneg %p84
      %p276 = pneg %p108
      %p277 = pneg %p105
      %p278 = pneg %p129
      %p279 = pneg %p126
      %p280 = pneg %p155
      %p281 = pneg %p152
      %s282 = smul.u32 32, %s19
      %p283 = scmp.lt.s32.totalorder %s282, 63
      %s284 = scalar_select %p283, %s282, 63
      %s285 = smul.addr %s284, 8
      %s286 = scalar_lea.vmem %s5, %s285
      %p287 = pneg %p181
      %p288 = pneg %p178
      %s289 = smul.u32 32, %s19
      %p290 = scmp.lt.s32.totalorder %s289, 63
      %s291 = scalar_select %p290, %s289, 63
      %s292 = smul.addr %s291, 8
      %s293 = scalar_lea.vmem %s6, %s292
      %p294 = pneg %p207
      %p295 = pneg %p204
      %p296 = scmp.lt.s32.totalorder %s19, 1
      %s297 = scalar_select %p296, %s19, 1
      %s298 = smul.addr %s297, 2
      %s299 = scalar_lea.vmem %s7, %s298
      %s300 = smul.u32 32, %s19
      %p301 = scmp.lt.s32.totalorder %s300, 63
      %s302 = scalar_select %p301, %s300, 63
      %s303 = smul.addr %s302, 4
      %s304 = scalar_lea.vmem %s0, %s303
      %s305 = smul.u32 32, %s19
      %s306 = smul.u32 32, %s19
      %p307 = scmp.lt.s32.totalorder %s306, 63
      %s308 = scalar_select %p307, %s306, 63
      %s309 = smul.addr %s308, 4
      %s310 = scalar_lea.vmem %s1, %s309
      %s311 = smul.u32 32, %s19
      %s312 = smul.u32 32, %s19
      %p313 = scmp.lt.s32.totalorder %s312, 63
      %s314 = scalar_select %p313, %s312, 63
      %s315 = smul.addr %s314, 8
      %s316 = scalar_lea.vmem %s5, %s315
      %s317 = smul.u32 32, %s19
      %s318 = smul.u32 32, %s19
      %p319 = scmp.lt.s32.totalorder %s318, 63
      %s320 = scalar_select %p319, %s318, 63
      %s321 = smul.addr %s320, 8
      %s322 = scalar_lea.vmem %s6, %s321
      %s323 = smul.u32 32, %s19
      %p324 = scmp.lt.s32.totalorder %s19, 1
      %s325 = scalar_select %p324, %s19, 1
      %s326 = smul.addr %s325, 2
      %s327 = scalar_lea.vmem %s7, %s326
      %v329 = vld [vmem:[%s304] sm:$0xf]
      %v330 = vld [vmem:[%s304 + $0x4] sm:$0xf]
      %v331 = vld [vmem:[%s304 + $0x8] sm:$0xf]
      %v332 = vld [vmem:[%s304 + $0xc] sm:$0xf]
      %v333 = vld [vmem:[%s304 + $0x10] sm:$0xf]
      %v334 = vld [vmem:[%s304 + $0x14] sm:$0xf]
      %v335 = vld [vmem:[%s304 + $0x18] sm:$0xf]
      %v336 = vld [vmem:[%s304 + $0x1c] sm:$0xf]
      %v337 = vld [vmem:[%s304 + $0x20] sm:$0xf]
      %v338 = vld [vmem:[%s304 + $0x24] sm:$0xf]
      %v339 = vld [vmem:[%s304 + $0x28] sm:$0xf]
      %v340 = vld [vmem:[%s304 + $0x2c] sm:$0xf]
      %v341 = vld [vmem:[%s304 + $0x30] sm:$0xf]
      %v342 = vld [vmem:[%s304 + $0x34] sm:$0xf]
      %v343 = vld [vmem:[%s304 + $0x38] sm:$0xf]
      %v344 = vld [vmem:[%s304 + $0x3c] sm:$0xf]
      %v345 = vld [vmem:[%s304 + $0x40] sm:$0xf]
      %v346 = vld [vmem:[%s304 + $0x44] sm:$0xf]
      %v347 = vld [vmem:[%s304 + $0x48] sm:$0xf]
      %v348 = vld [vmem:[%s304 + $0x4c] sm:$0xf]
      %v349 = vld [vmem:[%s304 + $0x50] sm:$0xf]
      %v350 = vld [vmem:[%s304 + $0x54] sm:$0xf]
      %v351 = vld [vmem:[%s304 + $0x58] sm:$0xf]
      %v352 = vld [vmem:[%s304 + $0x5c] sm:$0xf]
      %v353 = vld [vmem:[%s304 + $0x60] sm:$0xf]
      %v354 = vld [vmem:[%s304 + $0x64] sm:$0xf]
      %v355 = vld [vmem:[%s304 + $0x68] sm:$0xf]
      %v356 = vld [vmem:[%s304 + $0x6c] sm:$0xf]
      %v357 = vld [vmem:[%s304 + $0x70] sm:$0xf]
      %v358 = vld [vmem:[%s304 + $0x74] sm:$0xf]
      %v359 = vld [vmem:[%s304 + $0x78] sm:$0xf]
      %v360 = vld [vmem:[%s304 + $0x7c] sm:$0xf]
      %v361 = vld [vmem:[%s2] sm:$0xf]
      %v362 = vld [vmem:[%s2 + $0x4] sm:$0xf]
      %v363 = vld [vmem:[%s2 + $0x8] sm:$0xf]
      %v364 = vld [vmem:[%s2 + $0xc] sm:$0xf]
      %v365 = vld [vmem:[%s2 + $0x10] sm:$0xf]
      %v366 = vld [vmem:[%s2 + $0x14] sm:$0xf]
      %v367 = vld [vmem:[%s2 + $0x18] sm:$0xf]
      %v368 = vld [vmem:[%s2 + $0x1c] sm:$0xf]
      %v369 = vld [vmem:[%s2 + $0x20] sm:$0xf]
      %v402 = vunpack.c.l.b16 %v329
      %v403 = vunpack.c.l.b16 %v330
      %v404 = vunpack.c.l.b16 %v331
      %v405 = vunpack.c.l.b16 %v332
      %v406 = vunpack.c.l.b16 %v333
      %v407 = vunpack.c.l.b16 %v334
      %v408 = vunpack.c.l.b16 %v335
      %v409 = vunpack.c.l.b16 %v336
      %v410 = vunpack.c.l.b16 %v337
      %v411 = vunpack.c.l.b16 %v338
      %v412 = vunpack.c.l.b16 %v339
      %v413 = vunpack.c.l.b16 %v340
      %v414 = vunpack.c.l.b16 %v341
      %v415 = vunpack.c.l.b16 %v342
      %v416 = vunpack.c.l.b16 %v343
      %v417 = vunpack.c.l.b16 %v344
      %v418 = vunpack.c.l.b16 %v345
      %v419 = vunpack.c.l.b16 %v346
      %v420 = vunpack.c.l.b16 %v347
      %v421 = vunpack.c.l.b16 %v348
      %v422 = vunpack.c.l.b16 %v349
      %v423 = vunpack.c.l.b16 %v350
      %v424 = vunpack.c.l.b16 %v351
      %v425 = vunpack.c.l.b16 %v352
      %v426 = vunpack.c.l.b16 %v353
      %v427 = vunpack.c.l.b16 %v354
      %v428 = vunpack.c.l.b16 %v355
      %v429 = vunpack.c.l.b16 %v356
      %v430 = vunpack.c.l.b16 %v357
      %v431 = vunpack.c.l.b16 %v358
      %v432 = vunpack.c.l.b16 %v359
      %v433 = vunpack.c.l.b16 %v360
      %v434 = vpack.c.b16 %v403, %v402
      %v435 = vpack.c.b16 %v405, %v404
      %v436 = vpack.c.b16 %v407, %v406
      %v437 = vpack.c.b16 %v409, %v408
      %v438 = vpack.c.b16 %v411, %v410
      %v439 = vpack.c.b16 %v413, %v412
      %v440 = vpack.c.b16 %v415, %v414
      %v441 = vpack.c.b16 %v417, %v416
      %v442 = vpack.c.b16 %v419, %v418
      %v443 = vpack.c.b16 %v421, %v420
      %v444 = vpack.c.b16 %v423, %v422
      %v445 = vpack.c.b16 %v425, %v424
      %v446 = vpack.c.b16 %v427, %v426
      %v447 = vpack.c.b16 %v429, %v428
      %v448 = vpack.c.b16 %v431, %v430
      %v449 = vpack.c.b16 %v433, %v432
      %v459 = vunpack.c.l.b16 %v361
      %v460 = vunpack.c.l.b16 %v362
      %v461 = vunpack.c.l.b16 %v363
      %v462 = vunpack.c.l.b16 %v364
      %v463 = vunpack.c.l.b16 %v365
      %v464 = vunpack.c.l.b16 %v366
      %v465 = vunpack.c.l.b16 %v367
      %v466 = vunpack.c.l.b16 %v368
      %v467 = vunpack.c.l.b16 %v369
      %v468 = vpack.c.b16 %v460, %v459
      %v469 = vpack.c.b16 %v462, %v461
      %v470 = vpack.c.b16 %v464, %v463
      %v471 = vpack.c.b16 %v466, %v465
      %v472 = vpack.c.b16 %v467, %v467
      %vm477 = vcmask 588800
      %v479 = vsel %vm477, %v434, 0
      %v482 = vsel %vm477, %v435, 0
      %v485 = vsel %vm477, %v436, 0
      %v488 = vsel %vm477, %v437, 0
      %v491 = vsel %vm477, %v438, 0
      %v494 = vsel %vm477, %v439, 0
      %v497 = vsel %vm477, %v440, 0
      %v500 = vsel %vm477, %v441, 0
      %v503 = vsel %vm477, %v442, 0
      %v506 = vsel %vm477, %v443, 0
      %v509 = vsel %vm477, %v444, 0
      %v512 = vsel %vm477, %v445, 0
      %v515 = vsel %vm477, %v446, 0
      %v518 = vsel %vm477, %v447, 0
      %v521 = vsel %vm477, %v448, 0
      %v524 = vsel %vm477, %v449, 0
      %vm526 = vcmask 1043456
      %v528 = vsel %vm526, %v472, 0
      %530 = vmatpush.bf16.msra.mxu0 0
      %531 = vmatpush.bf16.msra.mxu0 0
      %532 = vmatpush.bf16.msra.mxu0 0
      %533 = vmatpush.bf16.msra.mxu0 %v528
      %534 = vmatpush.bf16.msra.mxu0 %v471
      %535 = vmatpush.bf16.msra.mxu0 %v470
      %536 = vmatpush.bf16.msra.mxu0 %v469
      %537 = vmatpush.bf16.msra.mxu0 %v468
      %538 = vmatmul.bf16.gmra.mxu0 %v479
      %v539 = vpop.f32.mrf.mxu0
      %v540 = vadd.f32 0.0, %v539
      %v541 = vpop.f32.mrf.mxu0
      %v542 = vadd.f32 0.0, %v541
      %543 = vmatmul.bf16.gmra.mxu0 %v482
      %v544 = vpop.f32.mrf.mxu0
      %v545 = vadd.f32 0.0, %v544
      %v546 = vpop.f32.mrf.mxu0
      %v547 = vadd.f32 0.0, %v546
      %548 = vmatmul.bf16.gmra.mxu0 %v485
      %v549 = vpop.f32.mrf.mxu0
      %v550 = vadd.f32 0.0, %v549
      %v551 = vpop.f32.mrf.mxu0
      %v552 = vadd.f32 0.0, %v551
      %553 = vmatmul.bf16.gmra.mxu0 %v488
      %v554 = vpop.f32.mrf.mxu0
      %v555 = vadd.f32 0.0, %v554
      %v556 = vpop.f32.mrf.mxu0
      %v557 = vadd.f32 0.0, %v556
      %558 = vmatmul.bf16.gmra.mxu0 %v491
      %v559 = vpop.f32.mrf.mxu0
      %v560 = vadd.f32 0.0, %v559
      %v561 = vpop.f32.mrf.mxu0
      %v562 = vadd.f32 0.0, %v561
      %563 = vmatmul.bf16.gmra.mxu0 %v494
      %v564 = vpop.f32.mrf.mxu0
      %v565 = vadd.f32 0.0, %v564
      %v566 = vpop.f32.mrf.mxu0
      %v567 = vadd.f32 0.0, %v566
      %568 = vmatmul.bf16.gmra.mxu0 %v497
      %v569 = vpop.f32.mrf.mxu0
      %v570 = vadd.f32 0.0, %v569
      %v571 = vpop.f32.mrf.mxu0
      %v572 = vadd.f32 0.0, %v571
      %573 = vmatmul.bf16.gmra.mxu0 %v500
      %v574 = vpop.f32.mrf.mxu0
      %v575 = vadd.f32 0.0, %v574
      %v576 = vpop.f32.mrf.mxu0
      %v577 = vadd.f32 0.0, %v576
      %578 = vmatmul.bf16.gmra.mxu0 %v503
      %v579 = vpop.f32.mrf.mxu0
      %v580 = vadd.f32 0.0, %v579
      %v581 = vpop.f32.mrf.mxu0
      %v582 = vadd.f32 0.0, %v581
      %583 = vmatmul.bf16.gmra.mxu0 %v506
      %v584 = vpop.f32.mrf.mxu0
      %v585 = vadd.f32 0.0, %v584
      %v586 = vpop.f32.mrf.mxu0
      %v587 = vadd.f32 0.0, %v586
      %588 = vmatmul.bf16.gmra.mxu0 %v509
      %v589 = vpop.f32.mrf.mxu0
      %v590 = vadd.f32 0.0, %v589
      %v591 = vpop.f32.mrf.mxu0
      %v592 = vadd.f32 0.0, %v591
      %593 = vmatmul.bf16.gmra.mxu0 %v512
      %v594 = vpop.f32.mrf.mxu0
      %v595 = vadd.f32 0.0, %v594
      %v596 = vpop.f32.mrf.mxu0
      %v597 = vadd.f32 0.0, %v596
      %598 = vmatmul.bf16.gmra.mxu0 %v515
      %v599 = vpop.f32.mrf.mxu0
      %v600 = vadd.f32 0.0, %v599
      %v601 = vpop.f32.mrf.mxu0
      %v602 = vadd.f32 0.0, %v601
      %603 = vmatmul.bf16.gmra.mxu0 %v518
      %v604 = vpop.f32.mrf.mxu0
      %v605 = vadd.f32 0.0, %v604
      %v606 = vpop.f32.mrf.mxu0
      %v607 = vadd.f32 0.0, %v606
      %608 = vmatmul.bf16.gmra.mxu0 %v521
      %v609 = vpop.f32.mrf.mxu0
      %v610 = vadd.f32 0.0, %v609
      %v611 = vpop.f32.mrf.mxu0
      %v612 = vadd.f32 0.0, %v611
      %613 = vmatmul.bf16.gmra.mxu0 %v524
      %v614 = vpop.f32.mrf.mxu0
      %v615 = vadd.f32 0.0, %v614
      %v616 = vpop.f32.mrf.mxu0
      %v617 = vadd.f32 0.0, %v616
      %618 = vdwg.mxu0
      %vm619 = vcmask 64512
      %620 = vst.msk [vmem:[%s316] sm:$0xff] %vm619, %v540
      %621 = vst.msk [vmem:[%s316 + $0x8] sm:$0xff] %vm619, %v542
      %622 = vst.msk [vmem:[%s316 + $0x10] sm:$0xff] %vm619, %v545
      %623 = vst.msk [vmem:[%s316 + $0x18] sm:$0xff] %vm619, %v547
      %624 = vst.msk [vmem:[%s316 + $0x20] sm:$0xff] %vm619, %v550
      %625 = vst.msk [vmem:[%s316 + $0x28] sm:$0xff] %vm619, %v552
      %626 = vst.msk [vmem:[%s316 + $0x30] sm:$0xff] %vm619, %v555
      %627 = vst.msk [vmem:[%s316 + $0x38] sm:$0xff] %vm619, %v557
      %628 = vst.msk [vmem:[%s316 + $0x40] sm:$0xff] %vm619, %v560
      %629 = vst.msk [vmem:[%s316 + $0x48] sm:$0xff] %vm619, %v562
      %630 = vst.msk [vmem:[%s316 + $0x50] sm:$0xff] %vm619, %v565
      %631 = vst.msk [vmem:[%s316 + $0x58] sm:$0xff] %vm619, %v567
      %632 = vst.msk [vmem:[%s316 + $0x60] sm:$0xff] %vm619, %v570
      %633 = vst.msk [vmem:[%s316 + $0x68] sm:$0xff] %vm619, %v572
      %634 = vst.msk [vmem:[%s316 + $0x70] sm:$0xff] %vm619, %v575
      %635 = vst.msk [vmem:[%s316 + $0x78] sm:$0xff] %vm619, %v577
      %636 = vst.msk [vmem:[%s316 + $0x80] sm:$0xff] %vm619, %v580
      %637 = vst.msk [vmem:[%s316 + $0x88] sm:$0xff] %vm619, %v582
      %638 = vst.msk [vmem:[%s316 + $0x90] sm:$0xff] %vm619, %v585
      %639 = vst.msk [vmem:[%s316 + $0x98] sm:$0xff] %vm619, %v587
      %640 = vst.msk [vmem:[%s316 + $0xa0] sm:$0xff] %vm619, %v590
      %641 = vst.msk [vmem:[%s316 + $0xa8] sm:$0xff] %vm619, %v592
      %642 = vst.msk [vmem:[%s316 + $0xb0] sm:$0xff] %vm619, %v595
      %643 = vst.msk [vmem:[%s316 + $0xb8] sm:$0xff] %vm619, %v597
      %644 = vst.msk [vmem:[%s316 + $0xc0] sm:$0xff] %vm619, %v600
      %645 = vst.msk [vmem:[%s316 + $0xc8] sm:$0xff] %vm619, %v602
      %646 = vst.msk [vmem:[%s316 + $0xd0] sm:$0xff] %vm619, %v605
      %647 = vst.msk [vmem:[%s316 + $0xd8] sm:$0xff] %vm619, %v607
      %648 = vst.msk [vmem:[%s316 + $0xe0] sm:$0xff] %vm619, %v610
      %649 = vst.msk [vmem:[%s316 + $0xe8] sm:$0xff] %vm619, %v612
      %650 = vst.msk [vmem:[%s316 + $0xf0] sm:$0xff] %vm619, %v615
      %651 = vst.msk [vmem:[%s316 + $0xf8] sm:$0xff] %vm619, %v617
      %v652 = vld [vmem:[%s310] sm:$0xf]
      %v653 = vld [vmem:[%s310 + $0x4] sm:$0xf]
      %v654 = vld [vmem:[%s310 + $0x8] sm:$0xf]
      %v655 = vld [vmem:[%s310 + $0xc] sm:$0xf]
      %v656 = vld [vmem:[%s310 + $0x10] sm:$0xf]
      %v657 = vld [vmem:[%s310 + $0x14] sm:$0xf]
      %v658 = vld [vmem:[%s310 + $0x18] sm:$0xf]
      %v659 = vld [vmem:[%s310 + $0x1c] sm:$0xf]
      %v660 = vld [vmem:[%s310 + $0x20] sm:$0xf]
      %v661 = vld [vmem:[%s310 + $0x24] sm:$0xf]
      %v662 = vld [vmem:[%s310 + $0x28] sm:$0xf]
      %v663 = vld [vmem:[%s310 + $0x2c] sm:$0xf]
      %v664 = vld [vmem:[%s310 + $0x30] sm:$0xf]
      %v665 = vld [vmem:[%s310 + $0x34] sm:$0xf]
      %v666 = vld [vmem:[%s310 + $0x38] sm:$0xf]
      %v667 = vld [vmem:[%s310 + $0x3c] sm:$0xf]
      %v668 = vld [vmem:[%s310 + $0x40] sm:$0xf]
      %v669 = vld [vmem:[%s310 + $0x44] sm:$0xf]
      %v670 = vld [vmem:[%s310 + $0x48] sm:$0xf]
      %v671 = vld [vmem:[%s310 + $0x4c] sm:$0xf]
      %v672 = vld [vmem:[%s310 + $0x50] sm:$0xf]
      %v673 = vld [vmem:[%s310 + $0x54] sm:$0xf]
      %v674 = vld [vmem:[%s310 + $0x58] sm:$0xf]
      %v675 = vld [vmem:[%s310 + $0x5c] sm:$0xf]
      %v676 = vld [vmem:[%s310 + $0x60] sm:$0xf]
      %v677 = vld [vmem:[%s310 + $0x64] sm:$0xf]
      %v678 = vld [vmem:[%s310 + $0x68] sm:$0xf]
      %v679 = vld [vmem:[%s310 + $0x6c] sm:$0xf]
      %v680 = vld [vmem:[%s310 + $0x70] sm:$0xf]
      %v681 = vld [vmem:[%s310 + $0x74] sm:$0xf]
      %v682 = vld [vmem:[%s310 + $0x78] sm:$0xf]
      %v683 = vld [vmem:[%s310 + $0x7c] sm:$0xf]
      %v684 = vld [vmem:[%s3] sm:$0x3]
      %v685 = vld [vmem:[%s4] sm:$0x1]
      %v687 = vperm.slane %v685, 0
      %v721 = vunpack.c.l.b16 %v652
      %v722 = vunpack.c.l.b16 %v653
      %v723 = vunpack.c.l.b16 %v654
      %v724 = vunpack.c.l.b16 %v655
      %v725 = vunpack.c.l.b16 %v656
      %v726 = vunpack.c.l.b16 %v657
      %v727 = vunpack.c.l.b16 %v658
      %v728 = vunpack.c.l.b16 %v659
      %v729 = vunpack.c.l.b16 %v660
      %v730 = vunpack.c.l.b16 %v661
      %v731 = vunpack.c.l.b16 %v662
      %v732 = vunpack.c.l.b16 %v663
      %v733 = vunpack.c.l.b16 %v664
      %v734 = vunpack.c.l.b16 %v665
      %v735 = vunpack.c.l.b16 %v666
      %v736 = vunpack.c.l.b16 %v667
      %v737 = vunpack.c.l.b16 %v668
      %v738 = vunpack.c.l.b16 %v669
      %v739 = vunpack.c.l.b16 %v670
      %v740 = vunpack.c.l.b16 %v671
      %v741 = vunpack.c.l.b16 %v672
      %v742 = vunpack.c.l.b16 %v673
      %v743 = vunpack.c.l.b16 %v674
      %v744 = vunpack.c.l.b16 %v675
      %v745 = vunpack.c.l.b16 %v676
      %v746 = vunpack.c.l.b16 %v677
      %v747 = vunpack.c.l.b16 %v678
      %v748 = vunpack.c.l.b16 %v679
      %v749 = vunpack.c.l.b16 %v680
      %v750 = vunpack.c.l.b16 %v681
      %v751 = vunpack.c.l.b16 %v682
      %v752 = vunpack.c.l.b16 %v683
      %v753 = vpack.c.b16 %v722, %v721
      %v754 = vpack.c.b16 %v724, %v723
      %v755 = vpack.c.b16 %v726, %v725
      %v756 = vpack.c.b16 %v728, %v727
      %v757 = vpack.c.b16 %v730, %v729
      %v758 = vpack.c.b16 %v732, %v731
      %v759 = vpack.c.b16 %v734, %v733
      %v760 = vpack.c.b16 %v736, %v735
      %v761 = vpack.c.b16 %v738, %v737
      %v762 = vpack.c.b16 %v740, %v739
      %v763 = vpack.c.b16 %v742, %v741
      %v764 = vpack.c.b16 %v744, %v743
      %v765 = vpack.c.b16 %v746, %v745
      %v766 = vpack.c.b16 %v748, %v747
      %v767 = vpack.c.b16 %v750, %v749
      %v768 = vpack.c.b16 %v752, %v751
      %vm769 = vcmask 31744
      %v771 = vsel %vm769, %v753, 0
      %v774 = vsel %vm769, %v754, 0
      %v777 = vsel %vm769, %v755, 0
      %v780 = vsel %vm769, %v756, 0
      %v783 = vsel %vm769, %v757, 0
      %v786 = vsel %vm769, %v758, 0
      %v789 = vsel %vm769, %v759, 0
      %v792 = vsel %vm769, %v760, 0
      %v795 = vsel %vm769, %v761, 0
      %v798 = vsel %vm769, %v762, 0
      %v801 = vsel %vm769, %v763, 0
      %v804 = vsel %vm769, %v764, 0
      %v807 = vsel %vm769, %v765, 0
      %v810 = vsel %vm769, %v766, 0
      %v813 = vsel %vm769, %v767, 0
      %v816 = vsel %vm769, %v768, 0
      %vm818 = vcmask 1041408
      %v820 = vsel %vm818, %v684, 0
      %822 = vmatpush.bf16.msra.mxu0 0
      %823 = vmatpush.bf16.msra.mxu0 0
      %824 = vmatpush.bf16.msra.mxu0 0
      %825 = vmatpush.bf16.msra.mxu0 0
      %826 = vmatpush.bf16.msra.mxu0 0
      %827 = vmatpush.bf16.msra.mxu0 0
      %828 = vmatpush.bf16.msra.mxu0 0
      %829 = vmatpush.bf16.msra.mxu0 %v820
      %830 = vmatmul.bf16.gmra.mxu0 %v771
      %v831 = vpop.f32.mrf.mxu0
      %v832 = vadd.f32 %v687, %v831
      %v833 = vpop.f32.mrf.mxu0
      %v834 = vadd.f32 %v687, %v833
      %835 = vmatmul.bf16.gmra.mxu0 %v774
      %v836 = vpop.f32.mrf.mxu0
      %v837 = vadd.f32 %v687, %v836
      %v838 = vpop.f32.mrf.mxu0
      %v839 = vadd.f32 %v687, %v838
      %840 = vmatmul.bf16.gmra.mxu0 %v777
      %v841 = vpop.f32.mrf.mxu0
      %v842 = vadd.f32 %v687, %v841
      %v843 = vpop.f32.mrf.mxu0
      %v844 = vadd.f32 %v687, %v843
      %845 = vmatmul.bf16.gmra.mxu0 %v780
      %v846 = vpop.f32.mrf.mxu0
      %v847 = vadd.f32 %v687, %v846
      %v848 = vpop.f32.mrf.mxu0
      %v849 = vadd.f32 %v687, %v848
      %850 = vmatmul.bf16.gmra.mxu0 %v783
      %v851 = vpop.f32.mrf.mxu0
      %v852 = vadd.f32 %v687, %v851
      %v853 = vpop.f32.mrf.mxu0
      %v854 = vadd.f32 %v687, %v853
      %855 = vmatmul.bf16.gmra.mxu0 %v786
      %v856 = vpop.f32.mrf.mxu0
      %v857 = vadd.f32 %v687, %v856
      %v858 = vpop.f32.mrf.mxu0
      %v859 = vadd.f32 %v687, %v858
      %860 = vmatmul.bf16.gmra.mxu0 %v789
      %v861 = vpop.f32.mrf.mxu0
      %v862 = vadd.f32 %v687, %v861
      %v863 = vpop.f32.mrf.mxu0
      %v864 = vadd.f32 %v687, %v863
      %865 = vmatmul.bf16.gmra.mxu0 %v792
      %v866 = vpop.f32.mrf.mxu0
      %v867 = vadd.f32 %v687, %v866
      %v868 = vpop.f32.mrf.mxu0
      %v869 = vadd.f32 %v687, %v868
      %870 = vmatmul.bf16.gmra.mxu0 %v795
      %v871 = vpop.f32.mrf.mxu0
      %v872 = vadd.f32 %v687, %v871
      %v873 = vpop.f32.mrf.mxu0
      %v874 = vadd.f32 %v687, %v873
      %875 = vmatmul.bf16.gmra.mxu0 %v798
      %v876 = vpop.f32.mrf.mxu0
      %v877 = vadd.f32 %v687, %v876
      %v878 = vpop.f32.mrf.mxu0
      %v879 = vadd.f32 %v687, %v878
      %880 = vmatmul.bf16.gmra.mxu0 %v801
      %v881 = vpop.f32.mrf.mxu0
      %v882 = vadd.f32 %v687, %v881
      %v883 = vpop.f32.mrf.mxu0
      %v884 = vadd.f32 %v687, %v883
      %885 = vmatmul.bf16.gmra.mxu0 %v804
      %v886 = vpop.f32.mrf.mxu0
      %v887 = vadd.f32 %v687, %v886
      %v888 = vpop.f32.mrf.mxu0
      %v889 = vadd.f32 %v687, %v888
      %890 = vmatmul.bf16.gmra.mxu0 %v807
      %v891 = vpop.f32.mrf.mxu0
      %v892 = vadd.f32 %v687, %v891
      %v893 = vpop.f32.mrf.mxu0
      %v894 = vadd.f32 %v687, %v893
      %895 = vmatmul.bf16.gmra.mxu0 %v810
      %v896 = vpop.f32.mrf.mxu0
      %v897 = vadd.f32 %v687, %v896
      %v898 = vpop.f32.mrf.mxu0
      %v899 = vadd.f32 %v687, %v898
      %900 = vmatmul.bf16.gmra.mxu0 %v813
      %v901 = vpop.f32.mrf.mxu0
      %v902 = vadd.f32 %v687, %v901
      %v903 = vpop.f32.mrf.mxu0
      %v904 = vadd.f32 %v687, %v903
      %905 = vmatmul.bf16.gmra.mxu0 %v816
      %v906 = vpop.f32.mrf.mxu0
      %v907 = vadd.f32 %v687, %v906
      %v908 = vpop.f32.mrf.mxu0
      %v909 = vadd.f32 %v687, %v908
      %910 = vdwg.mxu0
      %911 = vst.msk [vmem:[%s322] sm:$0xff] %vm619, %v832
      %912 = vst.msk [vmem:[%s322 + $0x8] sm:$0xff] %vm619, %v834
      %913 = vst.msk [vmem:[%s322 + $0x10] sm:$0xff] %vm619, %v837
      %914 = vst.msk [vmem:[%s322 + $0x18] sm:$0xff] %vm619, %v839
      %915 = vst.msk [vmem:[%s322 + $0x20] sm:$0xff] %vm619, %v842
      %916 = vst.msk [vmem:[%s322 + $0x28] sm:$0xff] %vm619, %v844
      %917 = vst.msk [vmem:[%s322 + $0x30] sm:$0xff] %vm619, %v847
      %918 = vst.msk [vmem:[%s322 + $0x38] sm:$0xff] %vm619, %v849
      %919 = vst.msk [vmem:[%s322 + $0x40] sm:$0xff] %vm619, %v852
      %920 = vst.msk [vmem:[%s322 + $0x48] sm:$0xff] %vm619, %v854
      %921 = vst.msk [vmem:[%s322 + $0x50] sm:$0xff] %vm619, %v857
      %922 = vst.msk [vmem:[%s322 + $0x58] sm:$0xff] %vm619, %v859
      %923 = vst.msk [vmem:[%s322 + $0x60] sm:$0xff] %vm619, %v862
      %924 = vst.msk [vmem:[%s322 + $0x68] sm:$0xff] %vm619, %v864
      %925 = vst.msk [vmem:[%s322 + $0x70] sm:$0xff] %vm619, %v867
      %926 = vst.msk [vmem:[%s322 + $0x78] sm:$0xff] %vm619, %v869
      %927 = vst.msk [vmem:[%s322 + $0x80] sm:$0xff] %vm619, %v872
      %928 = vst.msk [vmem:[%s322 + $0x88] sm:$0xff] %vm619, %v874
      %929 = vst.msk [vmem:[%s322 + $0x90] sm:$0xff] %vm619, %v877
      %930 = vst.msk [vmem:[%s322 + $0x98] sm:$0xff] %vm619, %v879
      %931 = vst.msk [vmem:[%s322 + $0xa0] sm:$0xff] %vm619, %v882
      %932 = vst.msk [vmem:[%s322 + $0xa8] sm:$0xff] %vm619, %v884
      %933 = vst.msk [vmem:[%s322 + $0xb0] sm:$0xff] %vm619, %v887
      %934 = vst.msk [vmem:[%s322 + $0xb8] sm:$0xff] %vm619, %v889
      %935 = vst.msk [vmem:[%s322 + $0xc0] sm:$0xff] %vm619, %v892
      %936 = vst.msk [vmem:[%s322 + $0xc8] sm:$0xff] %vm619, %v894
      %937 = vst.msk [vmem:[%s322 + $0xd0] sm:$0xff] %vm619, %v897
      %938 = vst.msk [vmem:[%s322 + $0xd8] sm:$0xff] %vm619, %v899
      %939 = vst.msk [vmem:[%s322 + $0xe0] sm:$0xff] %vm619, %v902
      %940 = vst.msk [vmem:[%s322 + $0xe8] sm:$0xff] %vm619, %v904
      %941 = vst.msk [vmem:[%s322 + $0xf0] sm:$0xff] %vm619, %v907
      %942 = vst.msk [vmem:[%s322 + $0xf8] sm:$0xff] %vm619, %v909
      %v943 = vsel %vm619, %v540, 0.0
      %v944 = vsel %vm619, %v542, 0.0
      %v945 = vadd.f32 %v943, %v944
      %v946 = vsel %vm619, %v545, 0.0
      %v947 = vadd.f32 %v945, %v946
      %v948 = vsel %vm619, %v547, 0.0
      %v949 = vadd.f32 %v947, %v948
      %v950 = vsel %vm619, %v550, 0.0
      %v951 = vadd.f32 %v949, %v950
      %v952 = vsel %vm619, %v552, 0.0
      %v953 = vadd.f32 %v951, %v952
      %v954 = vsel %vm619, %v555, 0.0
      %v955 = vadd.f32 %v953, %v954
      %v956 = vsel %vm619, %v557, 0.0
      %v957 = vadd.f32 %v955, %v956
      %v958 = vsel %vm619, %v560, 0.0
      %v959 = vadd.f32 %v957, %v958
      %v960 = vsel %vm619, %v562, 0.0
      %v961 = vadd.f32 %v959, %v960
      %v962 = vsel %vm619, %v565, 0.0
      %v963 = vadd.f32 %v961, %v962
      %v964 = vsel %vm619, %v567, 0.0
      %v965 = vadd.f32 %v963, %v964
      %v966 = vsel %vm619, %v570, 0.0
      %v967 = vadd.f32 %v965, %v966
      %v968 = vsel %vm619, %v572, 0.0
      %v969 = vadd.f32 %v967, %v968
      %v970 = vsel %vm619, %v575, 0.0
      %v971 = vadd.f32 %v969, %v970
      %v972 = vsel %vm619, %v577, 0.0
      %v973 = vadd.f32 %v971, %v972
      %v974 = vsel %vm619, %v580, 0.0
      %v975 = vadd.f32 %v973, %v974
      %v976 = vsel %vm619, %v582, 0.0
      %v977 = vadd.f32 %v975, %v976
      %v978 = vsel %vm619, %v585, 0.0
      %v979 = vadd.f32 %v977, %v978
      %v980 = vsel %vm619, %v587, 0.0
      %v981 = vadd.f32 %v979, %v980
      %v982 = vsel %vm619, %v590, 0.0
      %v983 = vadd.f32 %v981, %v982
      %v984 = vsel %vm619, %v592, 0.0
      %v985 = vadd.f32 %v983, %v984
      %v986 = vsel %vm619, %v595, 0.0
      %v987 = vadd.f32 %v985, %v986
      %v988 = vsel %vm619, %v597, 0.0
      %v989 = vadd.f32 %v987, %v988
      %v990 = vsel %vm619, %v600, 0.0
      %v991 = vadd.f32 %v989, %v990
      %v992 = vsel %vm619, %v602, 0.0
      %v993 = vadd.f32 %v991, %v992
      %v994 = vsel %vm619, %v605, 0.0
      %v995 = vadd.f32 %v993, %v994
      %v996 = vsel %vm619, %v607, 0.0
      %v997 = vadd.f32 %v995, %v996
      %v998 = vsel %vm619, %v610, 0.0
      %v999 = vadd.f32 %v997, %v998
      %v1000 = vsel %vm619, %v612, 0.0
      %v1001 = vadd.f32 %v999, %v1000
      %v1002 = vsel %vm619, %v615, 0.0
      %v1003 = vadd.f32 %v1001, %v1002
      %v1004 = vsel %vm619, %v617, 0.0
      %v1005 = vadd.f32 %v1003, %v1004
      %v1006 = vrot.slane %v1005, 4
      %v1007 = vadd.f32 %v1005, %v1006
      %v1008 = vrot.slane %v1007, 2
      %v1009 = vadd.f32 %v1007, %v1008
      %v1010 = vrot.slane %v1009, 1
      %v1011 = vadd.f32 %v1009, %v1010
      %v1012 = vmul.f32 %v540, %v540
      %v1013 = vmul.f32 %v542, %v542
      %v1014 = vmul.f32 %v545, %v545
      %v1015 = vmul.f32 %v547, %v547
      %v1016 = vmul.f32 %v550, %v550
      %v1017 = vmul.f32 %v552, %v552
      %v1018 = vmul.f32 %v555, %v555
      %v1019 = vmul.f32 %v557, %v557
      %v1020 = vmul.f32 %v560, %v560
      %v1021 = vmul.f32 %v562, %v562
      %v1022 = vmul.f32 %v565, %v565
      %v1023 = vmul.f32 %v567, %v567
      %v1024 = vmul.f32 %v570, %v570
      %v1025 = vmul.f32 %v572, %v572
      %v1026 = vmul.f32 %v575, %v575
      %v1027 = vmul.f32 %v577, %v577
      %v1028 = vmul.f32 %v580, %v580
      %v1029 = vmul.f32 %v582, %v582
      %v1030 = vmul.f32 %v585, %v585
      %v1031 = vmul.f32 %v587, %v587
      %v1032 = vmul.f32 %v590, %v590
      %v1033 = vmul.f32 %v592, %v592
      %v1034 = vmul.f32 %v595, %v595
      %v1035 = vmul.f32 %v597, %v597
      %v1036 = vmul.f32 %v600, %v600
      %v1037 = vmul.f32 %v602, %v602
      %v1038 = vmul.f32 %v605, %v605
      %v1039 = vmul.f32 %v607, %v607
      %v1040 = vmul.f32 %v610, %v610
      %v1041 = vmul.f32 %v612, %v612
      %v1042 = vmul.f32 %v615, %v615
      %v1043 = vmul.f32 %v617, %v617
      %v1044 = vsel %vm619, %v1012, 0.0
      %v1045 = vsel %vm619, %v1013, 0.0
      %v1046 = vadd.f32 %v1044, %v1045
      %v1047 = vsel %vm619, %v1014, 0.0
      %v1048 = vadd.f32 %v1046, %v1047
      %v1049 = vsel %vm619, %v1015, 0.0
      %v1050 = vadd.f32 %v1048, %v1049
      %v1051 = vsel %vm619, %v1016, 0.0
      %v1052 = vadd.f32 %v1050, %v1051
      %v1053 = vsel %vm619, %v1017, 0.0
      %v1054 = vadd.f32 %v1052, %v1053
      %v1055 = vsel %vm619, %v1018, 0.0
      %v1056 = vadd.f32 %v1054, %v1055
      %v1057 = vsel %vm619, %v1019, 0.0
      %v1058 = vadd.f32 %v1056, %v1057
      %v1059 = vsel %vm619, %v1020, 0.0
      %v1060 = vadd.f32 %v1058, %v1059
      %v1061 = vsel %vm619, %v1021, 0.0
      %v1062 = vadd.f32 %v1060, %v1061
      %v1063 = vsel %vm619, %v1022, 0.0
      %v1064 = vadd.f32 %v1062, %v1063
      %v1065 = vsel %vm619, %v1023, 0.0
      %v1066 = vadd.f32 %v1064, %v1065
      %v1067 = vsel %vm619, %v1024, 0.0
      %v1068 = vadd.f32 %v1066, %v1067
      %v1069 = vsel %vm619, %v1025, 0.0
      %v1070 = vadd.f32 %v1068, %v1069
      %v1071 = vsel %vm619, %v1026, 0.0
      %v1072 = vadd.f32 %v1070, %v1071
      %v1073 = vsel %vm619, %v1027, 0.0
      %v1074 = vadd.f32 %v1072, %v1073
      %v1075 = vsel %vm619, %v1028, 0.0
      %v1076 = vadd.f32 %v1074, %v1075
      %v1077 = vsel %vm619, %v1029, 0.0
      %v1078 = vadd.f32 %v1076, %v1077
      %v1079 = vsel %vm619, %v1030, 0.0
      %v1080 = vadd.f32 %v1078, %v1079
      %v1081 = vsel %vm619, %v1031, 0.0
      %v1082 = vadd.f32 %v1080, %v1081
      %v1083 = vsel %vm619, %v1032, 0.0
      %v1084 = vadd.f32 %v1082, %v1083
      %v1085 = vsel %vm619, %v1033, 0.0
      %v1086 = vadd.f32 %v1084, %v1085
      %v1087 = vsel %vm619, %v1034, 0.0
      %v1088 = vadd.f32 %v1086, %v1087
      %v1089 = vsel %vm619, %v1035, 0.0
      %v1090 = vadd.f32 %v1088, %v1089
      %v1091 = vsel %vm619, %v1036, 0.0
      %v1092 = vadd.f32 %v1090, %v1091
      %v1093 = vsel %vm619, %v1037, 0.0
      %v1094 = vadd.f32 %v1092, %v1093
      %v1095 = vsel %vm619, %v1038, 0.0
      %v1096 = vadd.f32 %v1094, %v1095
      %v1097 = vsel %vm619, %v1039, 0.0
      %v1098 = vadd.f32 %v1096, %v1097
      %v1099 = vsel %vm619, %v1040, 0.0
      %v1100 = vadd.f32 %v1098, %v1099
      %v1101 = vsel %vm619, %v1041, 0.0
      %v1102 = vadd.f32 %v1100, %v1101
      %v1103 = vsel %vm619, %v1042, 0.0
      %v1104 = vadd.f32 %v1102, %v1103
      %v1105 = vsel %vm619, %v1043, 0.0
      %v1106 = vadd.f32 %v1104, %v1105
      %v1107 = vrot.slane %v1106, 4
      %v1108 = vadd.f32 %v1106, %v1107
      %v1109 = vrot.slane %v1108, 2
      %v1110 = vadd.f32 %v1108, %v1109
      %v1111 = vrot.slane %v1110, 1
      %v1112 = vadd.f32 %v1110, %v1111
      %vm1113 = vcmask 1040384
      %v1114 = vsel %vm1113, %v1011, %v1112
      %vm1115 = vcmask 58368
      %1116 = vst.msk [vmem:[%s327] sm:$0x3] %vm1115, %v1114
      %s1117 = smul.u32 32, %s19
      %p1118 = scmp.lt.s32.totalorder %s1117, 63
      %s1119 = scalar_select %p1118, %s1117, 63
      %s1120 = smul.addr %s1119, 8
      %s1121 = scalar_lea.vmem %s5, %s1120
      %s1122 = smul.u32 32, %s19
      %p1123 = scmp.lt.s32.totalorder %s1122, 63
      %s1124 = scalar_select %p1123, %s1122, 63
      %s1125 = smul.addr %s1124, 8
      %s1126 = scalar_lea.vmem %s6, %s1125
      %p1127 = scmp.lt.s32.totalorder %s19, 1
      %s1128 = scalar_select %p1127, %s19, 1
      %s1129 = smul.addr %s1128, 2
      %s1130 = scalar_lea.vmem %s7, %s1129
      // Predicated region
      $region41: #{residual_forward.6} parent=39 // pred_check
        %p1131 = pneg %p152
      $region42: #{residual_forward.6} parent=39 // pred_check_branch
        %1133 = sbr.rel (%p1131) target = $region44
      $region43: #{residual_forward.6} parent=39 // pred_region
        %s1134 = smul.u32 32, %s19
      $region44: #{residual_forward.6} parent=39 // pred_fallthru
        _
      // Predicated region
      $region45: #{residual_forward.6} parent=39 // pred_check
        %p1135 = pneg %p178
      $region46: #{residual_forward.6} parent=39 // pred_check_branch
        %1137 = sbr.rel (%p1135) target = $region48
      $region47: #{residual_forward.6} parent=39 // pred_region
        %s1138 = smul.u32 32, %s19
      $region48: #{residual_forward.6} parent=39 // pred_fallthru
        _
      // Predicated region
      $region49: #{residual_forward.6} parent=39 // pred_check
        %p1139 = pneg %p204
      $region50: #{residual_forward.6} parent=39 // pred_check_branch
        %1141 = sbr.rel (%p1139) target = $region52
      $region51: #{residual_forward.6} parent=39 // pred_region
        _
      $region52: #{residual_forward.6} parent=39 // pred_fallthru
        _
    $region40: #{residual_forward.6} parent=5 // pred_fallthru
      _
    %p1142 = scmp.le.s32.totalorder 2, %s14
    // Predicated region
    $region53: #{residual_forward.6} parent=5 // pred_check
      %p1143 = pneg %p1142
    $region54: #{residual_forward.6} parent=5 // pred_check_branch
      %1145 = sbr.rel (%p1143) target = $region56
    $region55: #{residual_forward.6} parent=5 // pred_region
      %s1146 = ssub.s32 %s14, 2
      // Predicated region
      $region57: #{residual_forward.6} parent=55 // pred_check
        %p1147 = pneg %p158
      $region58: #{residual_forward.6} parent=55 // pred_check_branch
        %1149 = sbr.rel (%p1147) target = $region60
      $region59: #{residual_forward.6} parent=55 // pred_region
        %s1150 = smul.u32 32, %s20
        %p1151 = scmp.lt.s32.totalorder %s1150, 63
        %s1152 = scalar_select %p1151, %s1150, 63
        %s1153 = smul.addr %s1152, 8
        %s1154 = scalar_lea.vmem %s5, %s1153
      $region60: #{residual_forward.6} parent=55 // pred_fallthru
        _
      // Predicated region
      $region61: #{residual_forward.6} parent=55 // pred_check
        %p1155 = pneg %p184
      $region62: #{residual_forward.6} parent=55 // pred_check_branch
        %1157 = sbr.rel (%p1155) target = $region64
      $region63: #{residual_forward.6} parent=55 // pred_region
        %s1158 = smul.u32 32, %s20
        %p1159 = scmp.lt.s32.totalorder %s1158, 63
        %s1160 = scalar_select %p1159, %s1158, 63
        %s1161 = smul.addr %s1160, 8
        %s1162 = scalar_lea.vmem %s6, %s1161
      $region64: #{residual_forward.6} parent=55 // pred_fallthru
        _
      // Predicated region
      $region65: #{residual_forward.6} parent=55 // pred_check
        %p1163 = pneg %p210
      $region66: #{residual_forward.6} parent=55 // pred_check_branch
        %1165 = sbr.rel (%p1163) target = $region68
      $region67: #{residual_forward.6} parent=55 // pred_region
        %p1166 = scmp.lt.s32.totalorder %s20, 1
        %s1167 = scalar_select %p1166, %s20, 1
        %s1168 = smul.addr %s1167, 2
        %s1169 = scalar_lea.vmem %s7, %s1168
      $region68: #{residual_forward.6} parent=55 // pred_fallthru
        _
    $region56: #{residual_forward.6} parent=5 // pred_fallthru
      _
  $region6: #{residual_forward.6} parent=0 // loop_footer
    %s18 = sadd.s32 1, %s14
  $region7: #{residual_forward.6} parent=0 // loop_footer_branch
    %13 = sbr.rel target = $region3
  $region8: #{residual_forward.6} parent=0 // loop_exit
    _

</llo_original>
